<compile_context>
chip_gen: v7x
topology: tpu7x:2x2x1
jax: 0.10.0
libtpu: 0.0.40
codegen_flags: <defaults>
</compile_context>

<pallas_src>
import jax
import jax.numpy as jnp
from jax.experimental import pallas as pl
from jax.experimental.pallas import tpu as pltpu


# ---------------------------------------------------------------------------
# Kernel: one grid step = `bt` graphs of one graph type (image or fact).
# ---------------------------------------------------------------------------
def _fused_rel_gcn_kernel(x_ref, xslab_ref, r_ref, a_ref,
                          wn_bd_ref, ws_ref, wr_bd_ref, b_ref, e_ref, s_ref,
                          o_ref):
    """Ref shapes (leading size-2 graph-type dim already squeezed):

    x_ref     : (bt, N, Din)          f32   node features (tall form)
    xslab_ref : (bt, N*Din)           f32   node features (lane-dense slab)
    r_ref     : (bt, N, N*Drel)       f32   relation features, lanes = (j, k)
    a_ref     : (bt, N, N)            f32   adjacency
    wn_bd_ref : (N*Din, N*Dout)       bf16  blockdiag(W_node)
    ws_ref    : (Din, Dout)           bf16  W_self
    wr_bd_ref : (N*Drel, N*Dout)      bf16  blockdiag(W_rel)
    b_ref     : (1, Dout)             f32   bias
    e_ref     : (N, N*Dout)           f32   one-hot lane expansion (E[j, (j,d)] = 1)
    s_ref     : (N*Dout, Dout)        f32   segment sum       (S[(j,d), d] = 1)
    o_ref     : (bt*N, Dout)          f32   output (tall; wrapper reshapes)
    """
    bt, n, din = x_ref.shape
    ndrel = r_ref.shape[-1]
    ndout = wr_bd_ref.shape[-1]
    f32 = jnp.float32
    bf16 = jnp.bfloat16

    # ---- MXU transforms: bf16 inputs (cast in-kernel), f32 accumulation ----
    # relation transform: rw[(b,i), j*Dout+d] = sum_k r[b,i,j,k] * W_rel[k,d]
    r2 = r_ref[...].reshape(bt * n, ndrel).astype(bf16)
    rw = jnp.dot(r2, wr_bd_ref[...], preferred_element_type=f32)        # (bt*n, n*dout)

    # neighbour transform in slab form: xw_slab[b, j*Dout+d] = xw[b, j, d]
    xw_slab = jnp.dot(xslab_ref[...].astype(bf16), wn_bd_ref[...],
                      preferred_element_type=f32)                        # (bt, n*dout)

    # self transform (tall form) + bias
    x2 = x_ref[...].reshape(bt * n, din).astype(bf16)
    xs = jnp.dot(x2, ws_ref[...], preferred_element_type=f32) + b_ref[...]   # (bt*n, dout)

    # ---- messages: m[b, i, (j,d)] = relu(rw[b,i,j,d] + xw[b,j,d]) ----
    m = jax.nn.relu(rw.reshape(bt, n, ndout) + xw_slab[:, None, :])      # (bt, n, n*dout)

    # ---- row-normalised adjacency, expanded across Dout lane segments ----
    a = a_ref[...].astype(f32)                                           # (bt, n, n)
    deg = jnp.sum(a, axis=-1, keepdims=True)
    a_norm = a * pl.reciprocal(jnp.maximum(deg, 1.0), approx=True)       # EUP slot
    a_exp = jnp.dot(a_norm.reshape(bt * n, n), e_ref[...],
                    preferred_element_type=f32)                          # (bt*n, n*dout)

    # ---- aggregation: h[(b,i), d] = sum_j a_norm[b,i,j] * m[b,i,j,d] ----
    wsum = a_exp * m.reshape(bt * n, ndout)
    h = jnp.dot(wsum, s_ref[...], preferred_element_type=f32)            # (bt*n, dout)

    o_ref[...] = jax.nn.relu(h + xs).astype(o_ref.dtype)


# ---------------------------------------------------------------------------
# Padded-tile VMEM accounting and batch-tile selection.
# ---------------------------------------------------------------------------
def _padded_tile_bytes(shape, itemsize):
    dims = list(shape)
    if len(dims) < 2:
        dims = [1] * (2 - len(dims)) + dims
    sub_tile = (8 * 4) // itemsize          # f32 -> 8 sublanes, bf16 -> 16
    sub = -(-dims[-2] // sub_tile) * sub_tile
    lane = -(-dims[-1] // 128) * 128
    lead = 1
    for d in dims[:-2]:
        lead *= d
    return lead * sub * lane * itemsize


def _vmem_footprint(bt, n, din, drel, dout):
    ndin, ndrel, ndout = n * din, n * drel, n * dout
    f32, bf16 = 4, 2
    pipelined = [   # double-buffered by the BlockSpec pipeline
        ((bt, n, din), f32), ((bt, ndin), f32), ((bt, n, ndrel), f32),
        ((bt, n, n), f32), ((bt * n, dout), f32),
        ((ndin, ndout), bf16), ((din, dout), bf16), ((ndrel, ndout), bf16),
        ((1, dout), f32), ((n, ndout), f32), ((ndout, dout), f32),
    ]
    scratch = [     # f32 intermediates within one step (conservative: all live)
        ((bt * n, ndout), f32), ((bt, ndout), f32), ((bt, n, ndout), f32),
        ((bt * n, ndout), f32), ((bt * n, ndout), f32),
        ((bt * n, dout), f32), ((bt * n, dout), f32),
    ]
    total = 2 * sum(_padded_tile_bytes(s, i) for s, i in pipelined)
    total += sum(_padded_tile_bytes(s, i) for s, i in scratch)
    return total


def _choose_bt(B, n, din, drel, dout, budget_bytes=10 << 20):
    """Batch tile: divides B exactly (no padded graphs), keeps the (bt, N*Din)
    slab block sublane-legal (bt % 8 == 0 or bt == B), fits a conservative VMEM
    budget, and prefers >= 2 blocks per graph type (>= 4 total grid steps so
    v7x's two TensorCores each pipeline >= 2 steps)."""
    cands = [d for d in range(1, B + 1) if B % d == 0 and (d % 8 == 0 or d == B)]
    fitting = [d for d in cands if _vmem_footprint(d, n, din, drel, dout) <= budget_bytes]
    if not fitting:
        return min(cands)
    multi = [d for d in fitting if B // d >= 2]
    return max(multi) if multi else max(fitting)


# ---------------------------------------------------------------------------
# Wrapper: mirrors GraphNeuralNet.forward (ImgGCN + FactGCN in one fused call).
# ---------------------------------------------------------------------------
def graph_neural_net(img_graph, kg_graph, img_params, kg_params, *, bt=None):
    img_x, img_r, img_a = img_graph
    kg_x, kg_r, kg_a = kg_graph

    # TODO(synk): heterogeneous node counts between image and fact graphs would need
    # per-type padding/masking; the fused kernel assumes matching shapes.
    assert img_x.shape == kg_x.shape and img_r.shape == kg_r.shape and img_a.shape == kg_a.shape

    B, N, Din = img_x.shape
    Drel = img_r.shape[-1]
    Dout = img_params["wn"].shape[1]
    NDin, NDrel, NDout = N * Din, N * Drel, N * Dout

    if bt is None:
        bt = _choose_bt(B, N, Din, Drel, Dout)
    assert B % bt == 0
    grid = (2, B // bt)

    # Stacked f32 inputs (bf16 cast happens inside the kernel — no extra HBM pass).
    # TODO(synk): in the full model the upstream producers should emit these stacked /
    # lane-dense layouts directly; here the stack and the last-two-dim reshape of `r`
    # are one-time host-side copies outside the kernel.
    x_all = jnp.stack([img_x, kg_x]).astype(jnp.float32)               # (2, B, N, Din)
    xslab_all = x_all.reshape(2, B, NDin)                              # (2, B, N*Din)
    r_all = jnp.stack([img_r, kg_r]).astype(jnp.float32).reshape(2, B, N, NDrel)
    a_all = jnp.stack([img_a, kg_a]).astype(jnp.float32)               # (2, B, N, N)

    # Block-diagonal weights: every transform becomes a lane-dense MXU matmul.
    eye_n = jnp.eye(N, dtype=jnp.float32)

    def _bd(w):
        return jnp.kron(eye_n, w.astype(jnp.float32))

    wn_bd = jnp.stack([_bd(img_params["wn"]), _bd(kg_params["wn"])]).astype(jnp.bfloat16)
    wr_bd = jnp.stack([_bd(img_params["wr"]), _bd(kg_params["wr"])]).astype(jnp.bfloat16)
    ws = jnp.stack([img_params["ws"], kg_params["ws"]]).astype(jnp.bfloat16)
    bias = jnp.stack([img_params["b"], kg_params["b"]]).astype(jnp.float32)   # (2, 1, Dout)

    # Exact 0/1 helper matrices (f32 so aggregation stays exact).
    e_mat = jnp.kron(eye_n, jnp.ones((1, Dout), jnp.float32))                  # (N, N*Dout)
    s_mat = jnp.kron(jnp.ones((N, 1), jnp.float32),
                     jnp.eye(Dout, dtype=jnp.float32))                         # (N*Dout, Dout)

    fp = _vmem_footprint(bt, N, Din, Drel, Dout)
    vmem_limit = int(min(56 << 20, max(12 << 20, 2 * fp)))

    operands = (x_all, xslab_all, r_all, a_all, wn_bd, ws, wr_bd, bias, e_mat, s_mat)
    flops = 2 * (2 * B) * (N * N * Drel * Dout + 2 * N * Din * Dout + 2 * N * N * Dout)
    bytes_accessed = sum(int(o.size) * o.dtype.itemsize for o in operands) \
        + 2 * B * N * Dout * 4

    out = pl.pallas_call(
        _fused_rel_gcn_kernel,
        out_shape=jax.ShapeDtypeStruct((2, B * N, Dout), jnp.float32),
        grid_spec=pltpu.PrefetchScalarGridSpec(
            num_scalar_prefetch=0,
            grid=grid,
            in_specs=[
                pl.BlockSpec((None, bt, N, Din), lambda g, b: (g, b, 0, 0)),
                pl.BlockSpec((None, bt, NDin), lambda g, b: (g, b, 0)),
                pl.BlockSpec((None, bt, N, NDrel), lambda g, b: (g, b, 0, 0)),
                pl.BlockSpec((None, bt, N, N), lambda g, b: (g, b, 0, 0)),
                pl.BlockSpec((None, NDin, NDout), lambda g, b: (g, 0, 0)),
                pl.BlockSpec((None, Din, Dout), lambda g, b: (g, 0, 0)),
                pl.BlockSpec((None, NDrel, NDout), lambda g, b: (g, 0, 0)),
                pl.BlockSpec((None, 1, Dout), lambda g, b: (g, 0, 0)),
                pl.BlockSpec((N, NDout), lambda g, b: (0, 0)),
                pl.BlockSpec((NDout, Dout), lambda g, b: (0, 0)),
            ],
            out_specs=pl.BlockSpec((None, bt * N, Dout), lambda g, b: (g, b, 0)),
        ),
        compiler_params=pltpu.CompilerParams(
            dimension_semantics=("parallel", "parallel"),
            vmem_limit_bytes=vmem_limit,
        ),
        cost_estimate=pl.CostEstimate(
            flops=int(flops),
            transcendentals=int(2 * B * N),
            bytes_accessed=int(bytes_accessed),
        ),
    )(*operands)

    img_out = out[0].reshape(B, N, Dout)   # metadata-only reshapes
    kg_out = out[1].reshape(B, N, Dout)
    return img_out, kg_out


# ---------------------------------------------------------------------------
# Pure-JAX reference (same bf16-matmul / f32-accumulate policy).
# ---------------------------------------------------------------------------
def rel_gcn_ref(x, r, a, p):
    xb = x.astype(jnp.bfloat16)
    rb = r.astype(jnp.bfloat16)
    wn = p["wn"].astype(jnp.bfloat16)
    ws = p["ws"].astype(jnp.bfloat16)
    wr = p["wr"].astype(jnp.bfloat16)

    xw = jnp.einsum("bnd,do->bno", xb, wn, preferred_element_type=jnp.float32)
    xs = jnp.einsum("bnd,do->bno", xb, ws, preferred_element_type=jnp.float32) + p["b"][None]
    rw = jnp.einsum("bijr,ro->bijo", rb, wr, preferred_element_type=jnp.float32)
    m = jax.nn.relu(xw[:, None, :, :] + rw)
    deg = jnp.sum(a, axis=-1, keepdims=True)
    a_norm = a / jnp.maximum(deg, 1.0)
    h = jnp.sum(a_norm[..., None] * m, axis=2)
    return jax.nn.relu(h + xs)


def init_gcn_params(key, in_dims, rel_dims, out_dims):
    k1, k2, k3 = jax.random.split(key, 3)
    scale_in = 1.0 / jnp.sqrt(in_dims)
    scale_rel = 1.0 / jnp.sqrt(rel_dims)
    return {
        "wn": jax.random.normal(k1, (in_dims, out_dims), jnp.float32) * scale_in,
        "wr": jax.random.normal(k2, (rel_dims, out_dims), jnp.float32) * scale_rel,
        "ws": jax.random.normal(k3, (in_dims, out_dims), jnp.float32) * scale_in,
        "b": jnp.zeros((1, out_dims), jnp.float32),
    }


if __name__ == "__main__":
    B, N = 16, 8
    IN_DIMS, REL_DIMS, OUT_DIMS = 32, 16, 32

    key = jax.random.PRNGKey(0)
    keys = jax.random.split(key, 8)

    # Image graph.
    img_x = jax.random.normal(keys[0], (B, N, IN_DIMS), jnp.float32)
    img_r = jax.random.normal(keys[1], (B, N, N, REL_DIMS), jnp.float32)
    img_a = (jax.random.uniform(keys[2], (B, N, N)) > 0.5).astype(jnp.float32)

    # Knowledge (fact) graph.
    kg_x = jax.random.normal(keys[3], (B, N, IN_DIMS), jnp.float32)
    kg_r = jax.random.normal(keys[4], (B, N, N, REL_DIMS), jnp.float32)
    kg_a = (jax.random.uniform(keys[5], (B, N, N)) > 0.5).astype(jnp.float32)

    img_params = init_gcn_params(keys[6], IN_DIMS, REL_DIMS, OUT_DIMS)
    kg_params = init_gcn_params(keys[7], IN_DIMS, REL_DIMS, OUT_DIMS)

    img_out, kg_out = graph_neural_net(
        (img_x, img_r, img_a), (kg_x, kg_r, kg_a), img_params, kg_params
    )
    jax.block_until_ready((img_out, kg_out))

    # Verify against the pure-JAX reference (same bf16 precision policy; only the
    # approximate reciprocal / accumulation order differ).
    img_ref = rel_gcn_ref(img_x, img_r, img_a, img_params)
    kg_ref = rel_gcn_ref(kg_x, kg_r, kg_a, kg_params)
    assert jnp.allclose(img_out, img_ref, atol=2e-2, rtol=2e-2)
    assert jnp.allclose(kg_out, kg_ref, atol=2e-2, rtol=2e-2)

    print("KERNEL_OK")
</pallas_src>

<mosaic_0001>
module attributes {stable_mosaic.version = 11 : i64} {
  func.func @_fused_rel_gcn_kernel(%arg0: i32, %arg1: i32, %arg2: memref<1x8x8x32xf32, #tpu.memory_space<vmem>>, %arg3: memref<1x8x256xf32, #tpu.memory_space<vmem>>, %arg4: memref<1x8x8x128xf32, #tpu.memory_space<vmem>>, %arg5: memref<1x8x8x8xf32, #tpu.memory_space<vmem>>, %arg6: memref<1x256x256xbf16, #tpu.memory_space<vmem>>, %arg7: memref<1x32x32xbf16, #tpu.memory_space<vmem>>, %arg8: memref<1x128x256xbf16, #tpu.memory_space<vmem>>, %arg9: memref<1x1x32xf32, #tpu.memory_space<vmem>>, %arg10: memref<8x256xf32, #tpu.memory_space<vmem>>, %arg11: memref<256x32xf32, #tpu.memory_space<vmem>>, %arg12: memref<1x64x32xf32, #tpu.memory_space<vmem>>) attributes {dimension_semantics = [#tpu.dimension_semantics<parallel>, #tpu.dimension_semantics<parallel>], iteration_bounds = array<i64: 2, 2>, scalar_prefetch = 0 : i64, scratch_operands = 0 : i64, tpu.core_type = #tpu.core_type<tc>, window_params = [{transform_indices = @transform_0, window_bounds = array<i64: 1, 8, 8, 32>}, {transform_indices = @transform_1, window_bounds = array<i64: 1, 8, 256>}, {transform_indices = @transform_2, window_bounds = array<i64: 1, 8, 8, 128>}, {transform_indices = @transform_3, window_bounds = array<i64: 1, 8, 8, 8>}, {transform_indices = @transform_4, window_bounds = array<i64: 1, 256, 256>}, {transform_indices = @transform_5, window_bounds = array<i64: 1, 32, 32>}, {transform_indices = @transform_6, window_bounds = array<i64: 1, 128, 256>}, {transform_indices = @transform_7, window_bounds = array<i64: 1, 1, 32>}, {pipeline_mode = #tpu.pipeline_mode<synchronous>, transform_indices = @transform_8, window_bounds = array<i64: 8, 256>}, {pipeline_mode = #tpu.pipeline_mode<synchronous>, transform_indices = @transform_9, window_bounds = array<i64: 256, 32>}, {transform_indices = @transform_10, window_bounds = array<i64: 1, 64, 32>}]} {
    %c0 = arith.constant 0 : index
    %c0_0 = arith.constant 0 : index
    %c0_1 = arith.constant 0 : index
    %c0_2 = arith.constant 0 : index
    %0 = vector.load %arg4[%c0, %c0_0, %c0_1, %c0_2] : memref<1x8x8x128xf32, #tpu.memory_space<vmem>>, vector<1x8x8x128xf32>
    %1 = vector.shape_cast %0 : vector<1x8x8x128xf32> to vector<8x8x128xf32>
    %2 = vector.shape_cast %1 : vector<8x8x128xf32> to vector<64x128xf32>
    %3 = arith.truncf %2 : vector<64x128xf32> to vector<64x128xbf16>
    %c0_3 = arith.constant 0 : index
    %c0_4 = arith.constant 0 : index
    %c0_5 = arith.constant 0 : index
    %4 = vector.load %arg8[%c0_3, %c0_4, %c0_5] : memref<1x128x256xbf16, #tpu.memory_space<vmem>>, vector<1x128x256xbf16>
    %5 = vector.shape_cast %4 : vector<1x128x256xbf16> to vector<128x256xbf16>
    %cst = arith.constant dense<0.000000e+00> : vector<64x256xf32>
    %6 = tpu.matmul %3, %5, %cst {dimension_numbers = #tpu.dot_dimension_numbers<[1], [0], [0], [1], [0, 0, 1, 1], [], []>} : vector<64x128xbf16>, vector<128x256xbf16>, vector<64x256xf32> -> vector<64x256xf32>
    %c0_6 = arith.constant 0 : index
    %c0_7 = arith.constant 0 : index
    %c0_8 = arith.constant 0 : index
    %7 = vector.load %arg3[%c0_6, %c0_7, %c0_8] : memref<1x8x256xf32, #tpu.memory_space<vmem>>, vector<1x8x256xf32>
    %8 = vector.shape_cast %7 : vector<1x8x256xf32> to vector<8x256xf32>
    %9 = arith.truncf %8 : vector<8x256xf32> to vector<8x256xbf16>
    %c0_9 = arith.constant 0 : index
    %c0_10 = arith.constant 0 : index
    %c0_11 = arith.constant 0 : index
    %10 = vector.load %arg6[%c0_9, %c0_10, %c0_11] : memref<1x256x256xbf16, #tpu.memory_space<vmem>>, vector<1x256x256xbf16>
    %11 = vector.shape_cast %10 : vector<1x256x256xbf16> to vector<256x256xbf16>
    %cst_12 = arith.constant dense<0.000000e+00> : vector<8x256xf32>
    %12 = tpu.matmul %9, %11, %cst_12 {dimension_numbers = #tpu.dot_dimension_numbers<[1], [0], [0], [1], [0, 0, 1, 1], [], []>} : vector<8x256xbf16>, vector<256x256xbf16>, vector<8x256xf32> -> vector<8x256xf32>
    %c0_13 = arith.constant 0 : index
    %c0_14 = arith.constant 0 : index
    %c0_15 = arith.constant 0 : index
    %c0_16 = arith.constant 0 : index
    %13 = vector.load %arg2[%c0_13, %c0_14, %c0_15, %c0_16] : memref<1x8x8x32xf32, #tpu.memory_space<vmem>>, vector<1x8x8x32xf32>
    %14 = vector.shape_cast %13 : vector<1x8x8x32xf32> to vector<8x8x32xf32>
    %15 = vector.shape_cast %14 : vector<8x8x32xf32> to vector<64x32xf32>
    %16 = arith.truncf %15 : vector<64x32xf32> to vector<64x32xbf16>
    %c0_17 = arith.constant 0 : index
    %c0_18 = arith.constant 0 : index
    %c0_19 = arith.constant 0 : index
    %17 = vector.load %arg7[%c0_17, %c0_18, %c0_19] : memref<1x32x32xbf16, #tpu.memory_space<vmem>>, vector<1x32x32xbf16>
    %18 = vector.shape_cast %17 : vector<1x32x32xbf16> to vector<32x32xbf16>
    %cst_20 = arith.constant dense<0.000000e+00> : vector<64x32xf32>
    %19 = tpu.matmul %16, %18, %cst_20 {dimension_numbers = #tpu.dot_dimension_numbers<[1], [0], [0], [1], [0, 0, 1, 1], [], []>} : vector<64x32xbf16>, vector<32x32xbf16>, vector<64x32xf32> -> vector<64x32xf32>
    %c0_21 = arith.constant 0 : index
    %c0_22 = arith.constant 0 : index
    %c0_23 = arith.constant 0 : index
    %20 = vector.load %arg9[%c0_21, %c0_22, %c0_23] : memref<1x1x32xf32, #tpu.memory_space<vmem>>, vector<1x1x32xf32>
    %21 = vector.shape_cast %20 : vector<1x1x32xf32> to vector<1x32xf32>
    %22 = vector.broadcast %21 : vector<1x32xf32> to vector<64x32xf32>
    %23 = arith.addf %19, %22 : vector<64x32xf32>
    %24 = vector.shape_cast %6 : vector<64x256xf32> to vector<8x8x256xf32>
    %25 = vector.shape_cast %12 : vector<8x256xf32> to vector<8x1x256xf32>
    %26 = vector.broadcast %25 : vector<8x1x256xf32> to vector<8x8x256xf32>
    %27 = arith.addf %24, %26 : vector<8x8x256xf32>
    %cst_24 = arith.constant 0.000000e+00 : f32
    %28 = vector.broadcast %cst_24 : f32 to vector<8x8x256xf32>
    %29 = arith.maximumf %27, %28 : vector<8x8x256xf32>
    %c0_25 = arith.constant 0 : index
    %c0_26 = arith.constant 0 : index
    %c0_27 = arith.constant 0 : index
    %c0_28 = arith.constant 0 : index
    %30 = vector.load %arg5[%c0_25, %c0_26, %c0_27, %c0_28] : memref<1x8x8x8xf32, #tpu.memory_space<vmem>>, vector<1x8x8x8xf32>
    %31 = vector.shape_cast %30 : vector<1x8x8x8xf32> to vector<8x8x8xf32>
    %cst_29 = arith.constant dense<0.000000e+00> : vector<8x8xf32>
    %32 = vector.multi_reduction <add>, %31, %cst_29 [2] : vector<8x8x8xf32> to vector<8x8xf32>
    %33 = vector.shape_cast %32 : vector<8x8xf32> to vector<8x8x1xf32>
    %cst_30 = arith.constant 1.000000e+00 : f32
    %34 = vector.broadcast %cst_30 : f32 to vector<8x8x1xf32>
    %35 = arith.maximumf %33, %34 : vector<8x8x1xf32>
    %36 = tpu.reciprocal %35 {approx = true} : vector<8x8x1xf32> -> vector<8x8x1xf32>
    %37 = vector.broadcast %36 : vector<8x8x1xf32> to vector<8x8x8xf32>
    %38 = arith.mulf %31, %37 : vector<8x8x8xf32>
    %39 = vector.shape_cast %38 : vector<8x8x8xf32> to vector<64x8xf32>
    %c0_31 = arith.constant 0 : index
    %c0_32 = arith.constant 0 : index
    %40 = vector.load %arg10[%c0_31, %c0_32] : memref<8x256xf32, #tpu.memory_space<vmem>>, vector<8x256xf32>
    %cst_33 = arith.constant dense<0.000000e+00> : vector<64x256xf32>
    %41 = tpu.matmul %39, %40, %cst_33 {dimension_numbers = #tpu.dot_dimension_numbers<[1], [0], [0], [1], [0, 0, 1, 1], [], []>} : vector<64x8xf32>, vector<8x256xf32>, vector<64x256xf32> -> vector<64x256xf32>
    %42 = vector.shape_cast %29 : vector<8x8x256xf32> to vector<64x256xf32>
    %43 = arith.mulf %41, %42 : vector<64x256xf32>
    %c0_34 = arith.constant 0 : index
    %c0_35 = arith.constant 0 : index
    %44 = vector.load %arg11[%c0_34, %c0_35] : memref<256x32xf32, #tpu.memory_space<vmem>>, vector<256x32xf32>
    %cst_36 = arith.constant dense<0.000000e+00> : vector<64x32xf32>
    %45 = tpu.matmul %43, %44, %cst_36 {dimension_numbers = #tpu.dot_dimension_numbers<[1], [0], [0], [1], [0, 0, 1, 1], [], []>} : vector<64x256xf32>, vector<256x32xf32>, vector<64x32xf32> -> vector<64x32xf32>
    %46 = arith.addf %45, %23 : vector<64x32xf32>
    %cst_37 = arith.constant 0.000000e+00 : f32
    %47 = vector.broadcast %cst_37 : f32 to vector<64x32xf32>
    %48 = arith.maximumf %46, %47 : vector<64x32xf32>
    %c0_38 = arith.constant 0 : index
    %c0_39 = arith.constant 0 : index
    %c0_40 = arith.constant 0 : index
    %49 = vector.load %arg12[%c0_38, %c0_39, %c0_40] : memref<1x64x32xf32, #tpu.memory_space<vmem>>, vector<1x64x32xf32>
    %50 = vector.shape_cast %49 : vector<1x64x32xf32> to vector<64x32xf32>
    %51 = vector.shape_cast %48 : vector<64x32xf32> to vector<1x64x32xf32>
    tpu.vector_store %arg12[%c0_38, %c0_39, %c0_40], %51 {strides = array<i32>} : memref<1x64x32xf32, #tpu.memory_space<vmem>>, vector<1x64x32xf32>,
    return
  }
  func.func @transform_0(%arg0: i32, %arg1: i32) -> (i32, i32, i32, i32) {
    %c0_i32 = arith.constant 0 : i32
    %c0_i32_0 = arith.constant 0 : i32
    %c0_i32_1 = arith.constant 0 : i32
    return %arg0, %arg1, %c0_i32, %c0_i32_0 : i32, i32, i32, i32
  }
  func.func @transform_1(%arg0: i32, %arg1: i32) -> (i32, i32, i32) {
    %c0_i32 = arith.constant 0 : i32
    %c0_i32_0 = arith.constant 0 : i32
    return %arg0, %arg1, %c0_i32 : i32, i32, i32
  }
  func.func @transform_2(%arg0: i32, %arg1: i32) -> (i32, i32, i32, i32) {
    %c0_i32 = arith.constant 0 : i32
    %c0_i32_0 = arith.constant 0 : i32
    %c0_i32_1 = arith.constant 0 : i32
    return %arg0, %arg1, %c0_i32, %c0_i32_0 : i32, i32, i32, i32
  }
  func.func @transform_3(%arg0: i32, %arg1: i32) -> (i32, i32, i32, i32) {
    %c0_i32 = arith.constant 0 : i32
    %c0_i32_0 = arith.constant 0 : i32
    %c0_i32_1 = arith.constant 0 : i32
    return %arg0, %arg1, %c0_i32, %c0_i32_0 : i32, i32, i32, i32
  }
  func.func @transform_4(%arg0: i32, %arg1: i32) -> (i32, i32, i32) {
    %c0_i32 = arith.constant 0 : i32
    %c0_i32_0 = arith.constant 0 : i32
    %c0_i32_1 = arith.constant 0 : i32
    return %arg0, %c0_i32, %c0_i32_0 : i32, i32, i32
  }
  func.func @transform_5(%arg0: i32, %arg1: i32) -> (i32, i32, i32) {
    %c0_i32 = arith.constant 0 : i32
    %c0_i32_0 = arith.constant 0 : i32
    %c0_i32_1 = arith.constant 0 : i32
    return %arg0, %c0_i32, %c0_i32_0 : i32, i32, i32
  }
  func.func @transform_6(%arg0: i32, %arg1: i32) -> (i32, i32, i32) {
    %c0_i32 = arith.constant 0 : i32
    %c0_i32_0 = arith.constant 0 : i32
    %c0_i32_1 = arith.constant 0 : i32
    return %arg0, %c0_i32, %c0_i32_0 : i32, i32, i32
  }
  func.func @transform_7(%arg0: i32, %arg1: i32) -> (i32, i32, i32) {
    %c0_i32 = arith.constant 0 : i32
    %c0_i32_0 = arith.constant 0 : i32
    %c0_i32_1 = arith.constant 0 : i32
    return %arg0, %c0_i32, %c0_i32_0 : i32, i32, i32
  }
  func.func @transform_8(%arg0: i32, %arg1: i32) -> (i32, i32) {
    %c0_i32 = arith.constant 0 : i32
    %c0_i32_0 = arith.constant 0 : i32
    %c0_i32_1 = arith.constant 0 : i32
    return %c0_i32, %c0_i32_0 : i32, i32
  }
  func.func @transform_9(%arg0: i32, %arg1: i32) -> (i32, i32) {
    %c0_i32 = arith.constant 0 : i32
    %c0_i32_0 = arith.constant 0 : i32
    %c0_i32_1 = arith.constant 0 : i32
    return %c0_i32, %c0_i32_0 : i32, i32
  }
  func.func @transform_10(%arg0: i32, %arg1: i32) -> (i32, i32, i32) {
    %c0_i32 = arith.constant 0 : i32
    %c0_i32_0 = arith.constant 0 : i32
    return %arg0, %arg1, %c0_i32 : i32, i32, i32
  }
}

</mosaic_0001>

<llo_original>
// kernel: tpu_custom_call.1
$region0: #{tpu_custom_call.1}
  #allocation0 [shape = 'u32[]', space=smem, size = 0x4, offset = 0x4, fixed_abs, tag = 'smem constant byte address 0x4 - core index']
  #allocation1 [shape = 'u32[144,128]{1,0:T(1,128)}', space=vmem, size = 0x12000, scoped, tag = 'internal scratch']
  %s0 = inlined_call_operand.hbm [shape: f32[2,16,8,32], index: 0, kind: input, shape index: {}]
  %s1 = inlined_call_operand.vmem [shape: f32[2,16,256], index: 1, kind: input, shape index: {}]
  %s2 = inlined_call_operand.hbm [shape: f32[2,16,8,128], index: 2, kind: input, shape index: {}]
  %s3 = inlined_call_operand.vmem [shape: f32[2,16,8,8], index: 3, kind: input, shape index: {}]
  %s4 = inlined_call_operand.vmem [shape: bf16[2,256,256], index: 4, kind: input, shape index: {}]
  %s5 = inlined_call_operand.vmem [shape: bf16[2,32,32], index: 5, kind: input, shape index: {}]
  %s6 = inlined_call_operand.hbm [shape: bf16[2,128,256], index: 6, kind: input, shape index: {}]
  %s7 = inlined_call_operand.vmem [shape: f32[2,1,32], index: 7, kind: input, shape index: {}]
  %s8 = inlined_call_operand.vmem [shape: f32[8,256], index: 8, kind: input, shape index: {}]
  %s9 = inlined_call_operand.vmem [shape: f32[256,32], index: 9, kind: input, shape index: {}]
  %s10 = inlined_call_operand.vmem [shape: f32[2,128,32], index: 10, kind: output, shape index: {}]
  %s11 = sld [smem:[#allocation0]]
  $region85: #{tpu_custom_call.1} parent=0
    _
  %s13 = ssub.s32 1, %s11
  %s14 = scalar_select 0, %s13, %s11
  $region1: #{tpu_custom_call.1} parent=0
    #allocation2 [shape = 'u8[65536]{0}', space=vmem, size = 0x10000, scoped, tag = 'input window, operand 0']
    #allocation3 [shape = 's32[2]{0}', space=sflag, size = 0x8, scoped, tag = 'scoped memory for tpu_custom_call.1']
    #allocation4 [shape = 'u8[65536]{0}', space=vmem, size = 0x10000, scoped, tag = 'input window, operand 2']
    #allocation5 [shape = 's32[2]{0}', space=sflag, size = 0x8, scoped, tag = 'scoped memory for tpu_custom_call.1']
    #allocation6 [shape = 'u8[131072]{0}', space=vmem, size = 0x20000, scoped, tag = 'input window, operand 6']
    %15 = vsyncpa [#allocation3], 0
    %s16 = scalar_lea.sflag [#allocation3], 1
    %17 = vsyncpa %s16, 0
    %18 = vsyncpa [#allocation5], 0
    %s19 = scalar_lea.sflag [#allocation5], 1
    %20 = vsyncpa %s19, 0
    loop: start=0, step=1, limit=6
    $region2: #{tpu_custom_call.1} parent=1 // loop_pre_header
      _
    $region3: #{tpu_custom_call.1} parent=1 // loop_header
      %s22 = sphi 0, %s26
      %p23 = scmp.ge.s32.totalorder %s22, 6
      %s29 = sphi 0, %s41
      %s30 = sphi 0, %s37
      %s31 = sphi 0, %s29
      %s32 = sphi 0, %s30
      %s33 = sphi 0, %s31
      %s34 = sphi 0, %s32
      %s46 = sphi 0, %s48
      %s49 = sphi 0, %s46
      %s50 = sphi 0, %s49
      %s66 = sphi 0, %s50
      %s74 = sphi 0, %s76
      %s77 = sphi 0, %s74
      %s78 = sphi 0, %s77
      %s94 = sphi 0, %s78
      %s102 = sphi 0, %s104
      %s105 = sphi 0, %s102
      %s106 = sphi 0, %s105
      %s122 = sphi 0, %s106
      %s130 = sphi 0, %s132
      %s133 = sphi 0, %s130
      %s134 = sphi 0, %s133
      %s150 = sphi 0, %s134
      %s156 = sphi 0, %s158
      %s159 = sphi 0, %s156
      %s160 = sphi 0, %s159
      %s176 = sphi 0, %s160
      %s182 = sphi 0, %s184
      %s185 = sphi 0, %s182
      %s186 = sphi 0, %s185
      %s202 = sphi 0, %s186
      %s208 = sphi 0, %s210
      %s211 = sphi 0, %s208
      %s212 = sphi 0, %s211
      %s228 = sphi 0, %s212
      %s234 = sphi 0, %s236
      %s237 = sphi 0, %s234
      %s238 = sphi 0, %s237
      %s254 = sphi 0, %s238
      %s258 = sphi 0, %s258
      %s260 = sphi 0, %s258
      %s261 = sphi 0, %s260
      %s275 = sphi 0, %s261
      %s279 = sphi 0, %s279
      %s281 = sphi 0, %s279
      %s282 = sphi 0, %s281
      %s296 = sphi 0, %s282
      %s304 = sphi 0, %s306
      %s307 = sphi 0, %s304
      %s308 = sphi 0, %s307
      %s324 = sphi 0, %s308
    $region4: #{tpu_custom_call.1} parent=1 // loop_header_branch
      %25 = sbr.rel (%p23) target = $region8
    $region5: #{tpu_custom_call.1} parent=1 // loop_body
      %s27 = ssub.s32 %s22, 1
      %s28 = ssub.s32 %s22, 2
      %s35 = sadd.s32 1, %s30
      %p36 = scmp.ge.s32.totalorder %s35, 2
      %s37 = scalar_select %p36, 0, %s35
      %s38 = sadd.s32 1, %s29
      %s39 = scalar_select %p36, %s38, %s29
      %p40 = scmp.ge.s32.totalorder %s39, 2
      %s41 = scalar_select %p40, 0, %s39
      %s42 = ssub.s32 %s29, %s41
      %s43 = ssub.s32 %s30, %s37
      %s44 = sor.u32 %s42, %s43
      %p45 = scmp.eq.s32.totalorder %s44, 0
      %s47 = sadd.s32 %s46, 1
      %s48 = scalar_select %p45, %s46, %s47
      %p51 = pneg %p45
      %p52 = scmp.eq.s32.totalorder %s22, 3
      %p53 = por %p51, %p52
      %p54 = scmp.ne.s32.totalorder %s46, %s49
      %p55 = scmp.eq.s32.totalorder %s22, 0
      %p56 = por %p54, %p55
      %p57 = scmp.ne.s32.totalorder %s46, %s49
      %p58 = scmp.eq.s32.totalorder %s27, 3
      %p59 = por %p57, %p58
      %p60 = scmp.ne.s32.totalorder %s49, %s50
      %p61 = scmp.eq.s32.totalorder %s27, 0
      %p62 = por %p60, %p61
      %p63 = scmp.ne.s32.totalorder %s49, %s50
      %p64 = scmp.eq.s32.totalorder %s28, 3
      %p65 = por %p63, %p64
      %p67 = scmp.ne.s32.totalorder %s50, %s66
      %p68 = scmp.eq.s32.totalorder %s28, 0
      %p69 = por %p67, %p68
      %s70 = ssub.s32 %s29, %s41
      %s71 = ssub.s32 %s30, %s37
      %s72 = sor.u32 %s70, %s71
      %p73 = scmp.eq.s32.totalorder %s72, 0
      %s75 = sadd.s32 %s74, 1
      %s76 = scalar_select %p73, %s74, %s75
      %p79 = pneg %p73
      %p80 = scmp.eq.s32.totalorder %s22, 3
      %p81 = por %p79, %p80
      %p82 = scmp.ne.s32.totalorder %s74, %s77
      %p83 = scmp.eq.s32.totalorder %s22, 0
      %p84 = por %p82, %p83
      %p85 = scmp.ne.s32.totalorder %s74, %s77
      %p86 = scmp.eq.s32.totalorder %s27, 3
      %p87 = por %p85, %p86
      %p88 = scmp.ne.s32.totalorder %s77, %s78
      %p89 = scmp.eq.s32.totalorder %s27, 0
      %p90 = por %p88, %p89
      %p91 = scmp.ne.s32.totalorder %s77, %s78
      %p92 = scmp.eq.s32.totalorder %s28, 3
      %p93 = por %p91, %p92
      %p95 = scmp.ne.s32.totalorder %s78, %s94
      %p96 = scmp.eq.s32.totalorder %s28, 0
      %p97 = por %p95, %p96
      %s98 = ssub.s32 %s29, %s41
      %s99 = ssub.s32 %s30, %s37
      %s100 = sor.u32 %s98, %s99
      %p101 = scmp.eq.s32.totalorder %s100, 0
      %s103 = sadd.s32 %s102, 1
      %s104 = scalar_select %p101, %s102, %s103
      %p107 = pneg %p101
      %p108 = scmp.eq.s32.totalorder %s22, 3
      %p109 = por %p107, %p108
      %p110 = scmp.ne.s32.totalorder %s102, %s105
      %p111 = scmp.eq.s32.totalorder %s22, 0
      %p112 = por %p110, %p111
      %p113 = scmp.ne.s32.totalorder %s102, %s105
      %p114 = scmp.eq.s32.totalorder %s27, 3
      %p115 = por %p113, %p114
      %p116 = scmp.ne.s32.totalorder %s105, %s106
      %p117 = scmp.eq.s32.totalorder %s27, 0
      %p118 = por %p116, %p117
      %p119 = scmp.ne.s32.totalorder %s105, %s106
      %p120 = scmp.eq.s32.totalorder %s28, 3
      %p121 = por %p119, %p120
      %p123 = scmp.ne.s32.totalorder %s106, %s122
      %p124 = scmp.eq.s32.totalorder %s28, 0
      %p125 = por %p123, %p124
      %s126 = ssub.s32 %s29, %s41
      %s127 = ssub.s32 %s30, %s37
      %s128 = sor.u32 %s126, %s127
      %p129 = scmp.eq.s32.totalorder %s128, 0
      %s131 = sadd.s32 %s130, 1
      %s132 = scalar_select %p129, %s130, %s131
      %p135 = pneg %p129
      %p136 = scmp.eq.s32.totalorder %s22, 3
      %p137 = por %p135, %p136
      %p138 = scmp.ne.s32.totalorder %s130, %s133
      %p139 = scmp.eq.s32.totalorder %s22, 0
      %p140 = por %p138, %p139
      %p141 = scmp.ne.s32.totalorder %s130, %s133
      %p142 = scmp.eq.s32.totalorder %s27, 3
      %p143 = por %p141, %p142
      %p144 = scmp.ne.s32.totalorder %s133, %s134
      %p145 = scmp.eq.s32.totalorder %s27, 0
      %p146 = por %p144, %p145
      %p147 = scmp.ne.s32.totalorder %s133, %s134
      %p148 = scmp.eq.s32.totalorder %s28, 3
      %p149 = por %p147, %p148
      %p151 = scmp.ne.s32.totalorder %s134, %s150
      %p152 = scmp.eq.s32.totalorder %s28, 0
      %p153 = por %p151, %p152
      %s154 = ssub.s32 %s29, %s41
      %p155 = scmp.eq.s32.totalorder %s154, 0
      %s157 = sadd.s32 %s156, 1
      %s158 = scalar_select %p155, %s156, %s157
      %p161 = pneg %p155
      %p162 = scmp.eq.s32.totalorder %s22, 3
      %p163 = por %p161, %p162
      %p164 = scmp.ne.s32.totalorder %s156, %s159
      %p165 = scmp.eq.s32.totalorder %s22, 0
      %p166 = por %p164, %p165
      %p167 = scmp.ne.s32.totalorder %s156, %s159
      %p168 = scmp.eq.s32.totalorder %s27, 3
      %p169 = por %p167, %p168
      %p170 = scmp.ne.s32.totalorder %s159, %s160
      %p171 = scmp.eq.s32.totalorder %s27, 0
      %p172 = por %p170, %p171
      %p173 = scmp.ne.s32.totalorder %s159, %s160
      %p174 = scmp.eq.s32.totalorder %s28, 3
      %p175 = por %p173, %p174
      %p177 = scmp.ne.s32.totalorder %s160, %s176
      %p178 = scmp.eq.s32.totalorder %s28, 0
      %p179 = por %p177, %p178
      %s180 = ssub.s32 %s29, %s41
      %p181 = scmp.eq.s32.totalorder %s180, 0
      %s183 = sadd.s32 %s182, 1
      %s184 = scalar_select %p181, %s182, %s183
      %p187 = pneg %p181
      %p188 = scmp.eq.s32.totalorder %s22, 3
      %p189 = por %p187, %p188
      %p190 = scmp.ne.s32.totalorder %s182, %s185
      %p191 = scmp.eq.s32.totalorder %s22, 0
      %p192 = por %p190, %p191
      %p193 = scmp.ne.s32.totalorder %s182, %s185
      %p194 = scmp.eq.s32.totalorder %s27, 3
      %p195 = por %p193, %p194
      %p196 = scmp.ne.s32.totalorder %s185, %s186
      %p197 = scmp.eq.s32.totalorder %s27, 0
      %p198 = por %p196, %p197
      %p199 = scmp.ne.s32.totalorder %s185, %s186
      %p200 = scmp.eq.s32.totalorder %s28, 3
      %p201 = por %p199, %p200
      %p203 = scmp.ne.s32.totalorder %s186, %s202
      %p204 = scmp.eq.s32.totalorder %s28, 0
      %p205 = por %p203, %p204
      %s206 = ssub.s32 %s29, %s41
      %p207 = scmp.eq.s32.totalorder %s206, 0
      %s209 = sadd.s32 %s208, 1
      %s210 = scalar_select %p207, %s208, %s209
      %p213 = pneg %p207
      %p214 = scmp.eq.s32.totalorder %s22, 3
      %p215 = por %p213, %p214
      %p216 = scmp.ne.s32.totalorder %s208, %s211
      %p217 = scmp.eq.s32.totalorder %s22, 0
      %p218 = por %p216, %p217
      %p219 = scmp.ne.s32.totalorder %s208, %s211
      %p220 = scmp.eq.s32.totalorder %s27, 3
      %p221 = por %p219, %p220
      %p222 = scmp.ne.s32.totalorder %s211, %s212
      %p223 = scmp.eq.s32.totalorder %s27, 0
      %p224 = por %p222, %p223
      %p225 = scmp.ne.s32.totalorder %s211, %s212
      %p226 = scmp.eq.s32.totalorder %s28, 3
      %p227 = por %p225, %p226
      %p229 = scmp.ne.s32.totalorder %s212, %s228
      %p230 = scmp.eq.s32.totalorder %s28, 0
      %p231 = por %p229, %p230
      %s232 = ssub.s32 %s29, %s41
      %p233 = scmp.eq.s32.totalorder %s232, 0
      %s235 = sadd.s32 %s234, 1
      %s236 = scalar_select %p233, %s234, %s235
      %p239 = pneg %p233
      %p240 = scmp.eq.s32.totalorder %s22, 3
      %p241 = por %p239, %p240
      %p242 = scmp.ne.s32.totalorder %s234, %s237
      %p243 = scmp.eq.s32.totalorder %s22, 0
      %p244 = por %p242, %p243
      %p245 = scmp.ne.s32.totalorder %s234, %s237
      %p246 = scmp.eq.s32.totalorder %s27, 3
      %p247 = por %p245, %p246
      %p248 = scmp.ne.s32.totalorder %s237, %s238
      %p249 = scmp.eq.s32.totalorder %s27, 0
      %p250 = por %p248, %p249
      %p251 = scmp.ne.s32.totalorder %s237, %s238
      %p252 = scmp.eq.s32.totalorder %s28, 3
      %p253 = por %p251, %p252
      %p255 = scmp.ne.s32.totalorder %s238, %s254
      %p256 = scmp.eq.s32.totalorder %s28, 0
      %p257 = por %p255, %p256
      %s259 = sadd.s32 %s258, 1
      %p262 = scmp.eq.s32.totalorder %s22, 3
      %p263 = scmp.ne.s32.totalorder %s258, %s260
      %p264 = scmp.eq.s32.totalorder %s22, 0
      %p265 = por %p263, %p264
      %p266 = scmp.ne.s32.totalorder %s258, %s260
      %p267 = scmp.eq.s32.totalorder %s27, 3
      %p268 = por %p266, %p267
      %p269 = scmp.ne.s32.totalorder %s260, %s261
      %p270 = scmp.eq.s32.totalorder %s27, 0
      %p271 = por %p269, %p270
      %p272 = scmp.ne.s32.totalorder %s260, %s261
      %p273 = scmp.eq.s32.totalorder %s28, 3
      %p274 = por %p272, %p273
      %p276 = scmp.ne.s32.totalorder %s261, %s275
      %p277 = scmp.eq.s32.totalorder %s28, 0
      %p278 = por %p276, %p277
      %s280 = sadd.s32 %s279, 1
      %p283 = scmp.eq.s32.totalorder %s22, 3
      %p284 = scmp.ne.s32.totalorder %s279, %s281
      %p285 = scmp.eq.s32.totalorder %s22, 0
      %p286 = por %p284, %p285
      %p287 = scmp.ne.s32.totalorder %s279, %s281
      %p288 = scmp.eq.s32.totalorder %s27, 3
      %p289 = por %p287, %p288
      %p290 = scmp.ne.s32.totalorder %s281, %s282
      %p291 = scmp.eq.s32.totalorder %s27, 0
      %p292 = por %p290, %p291
      %p293 = scmp.ne.s32.totalorder %s281, %s282
      %p294 = scmp.eq.s32.totalorder %s28, 3
      %p295 = por %p293, %p294
      %p297 = scmp.ne.s32.totalorder %s282, %s296
      %p298 = scmp.eq.s32.totalorder %s28, 0
      %p299 = por %p297, %p298
      %s300 = ssub.s32 %s29, %s41
      %s301 = ssub.s32 %s30, %s37
      %s302 = sor.u32 %s300, %s301
      %p303 = scmp.eq.s32.totalorder %s302, 0
      %s305 = sadd.s32 %s304, 1
      %s306 = scalar_select %p303, %s304, %s305
      %p309 = pneg %p303
      %p310 = scmp.eq.s32.totalorder %s22, 3
      %p311 = por %p309, %p310
      %p312 = scmp.ne.s32.totalorder %s304, %s307
      %p313 = scmp.eq.s32.totalorder %s22, 0
      %p314 = por %p312, %p313
      %p315 = scmp.ne.s32.totalorder %s304, %s307
      %p316 = scmp.eq.s32.totalorder %s27, 3
      %p317 = por %p315, %p316
      %p318 = scmp.ne.s32.totalorder %s307, %s308
      %p319 = scmp.eq.s32.totalorder %s27, 0
      %p320 = por %p318, %p319
      %p321 = scmp.ne.s32.totalorder %s307, %s308
      %p322 = scmp.eq.s32.totalorder %s28, 3
      %p323 = por %p321, %p322
      %p325 = scmp.ne.s32.totalorder %s308, %s324
      %p326 = scmp.eq.s32.totalorder %s28, 0
      %p327 = por %p325, %p326
      %p328 = scmp.le.s32.totalorder 1, %s22
      %p329 = scmp.lt.s32.totalorder %s22, 5
      %p330 = pnand %p328, %p329
      %p331 = pneg %p330
      // Predicated region
      $region9: #{tpu_custom_call.1} parent=5 // pred_check
        _
      $region10: #{tpu_custom_call.1} parent=5 // pred_check_branch
        %333 = sbr.rel (%p330) target = $region12
      $region11: #{tpu_custom_call.1} parent=5 // pred_region
        %s334 = ssub.s32 %s22, 1
        // Predicated region
        $region13: #{tpu_custom_call.1} parent=11 // pred_check
          %p335 = pneg %p271
        $region14: #{tpu_custom_call.1} parent=11 // pred_check_branch
          %337 = sbr.rel (%p335) target = $region16
        $region15: #{tpu_custom_call.1} parent=11 // pred_region
          _
        $region16: #{tpu_custom_call.1} parent=11 // pred_fallthru
          _
        // Predicated region
        $region17: #{tpu_custom_call.1} parent=11 // pred_check
          %p338 = pneg %p292
        $region18: #{tpu_custom_call.1} parent=11 // pred_check_branch
          %340 = sbr.rel (%p338) target = $region20
        $region19: #{tpu_custom_call.1} parent=11 // pred_region
          _
        $region20: #{tpu_custom_call.1} parent=11 // pred_fallthru
          _
      $region12: #{tpu_custom_call.1} parent=5 // pred_fallthru
        _
      %p341 = scmp.lt.s32.totalorder %s22, 4
      // Predicated region
      $region21: #{tpu_custom_call.1} parent=5 // pred_check
        %p342 = pneg %p341
      $region22: #{tpu_custom_call.1} parent=5 // pred_check_branch
        %344 = sbr.rel (%p342) target = $region24
      $region23: #{tpu_custom_call.1} parent=5 // pred_region
        // Predicated region
        $region25: #{tpu_custom_call.1} parent=23 // pred_check
          %p345 = pneg %p56
        $region26: #{tpu_custom_call.1} parent=23 // pred_check_branch
          %347 = sbr.rel (%p345) target = $region28
        $region27: #{tpu_custom_call.1} parent=23 // pred_region
          %s348 = sand.u32 %s46, 1
          %s349 = scalar_lea.sflag [#allocation3], %s348
          %s350 = sand.u32 %s46, 1
          %s351 = smul.addr %s350, 64
          %s352 = scalar_lea.vmem [#allocation2], %s351
          %s353 = smul.u32 8, %s30
          %s355 = ssub.s32 1024, 1024
          %356 = vsyncadd %s349, %s355
          %s357 = smul.addr %s29, 16
          %s358 = sadd.s32 %s353, %s357
          %s359 = smul.addr %s358, 128
          %s360 = scalar_lea.hbm %s0, %s359
          %s361 = sshll.u32 %s352, 4
          %s362 = int_to_ptr.vmem [resolvable:$true] %s361
          %367 = dma.hbm_to_vmem [thread:$0]  %s360, 1024, %s362, %s349, 128, 128, 8
        $region28: #{tpu_custom_call.1} parent=23 // pred_fallthru
          _
        // Predicated region
        $region29: #{tpu_custom_call.1} parent=23 // pred_check
          %p368 = pneg %p84
        $region30: #{tpu_custom_call.1} parent=23 // pred_check_branch
          %370 = sbr.rel (%p368) target = $region32
        $region31: #{tpu_custom_call.1} parent=23 // pred_region
          %p371 = scmp.lt.s32.totalorder %s29, 1
          %s372 = scalar_select %p371, %s29, 1
          %p373 = scmp.lt.s32.totalorder %s30, 1
          %s374 = scalar_select %p373, %s30, 1
          %s375 = smul.addr %s374, 2
          %s376 = smul.addr %s372, 4
          %s377 = sadd.s32 %s375, %s376
          %s378 = smul.addr %s377, 8
          %s379 = scalar_lea.vmem %s1, %s378
        $region32: #{tpu_custom_call.1} parent=23 // pred_fallthru
          _
        // Predicated region
        $region33: #{tpu_custom_call.1} parent=23 // pred_check
          %p380 = pneg %p112
        $region34: #{tpu_custom_call.1} parent=23 // pred_check_branch
          %382 = sbr.rel (%p380) target = $region36
        $region35: #{tpu_custom_call.1} parent=23 // pred_region
          %s383 = sand.u32 %s22, 1
          %s384 = scalar_lea.sflag [#allocation5], %s383
          %s385 = sand.u32 %s102, 1
          %s386 = smul.addr %s385, 64
          %s387 = scalar_lea.vmem [#allocation4], %s386
          %s388 = smul.u32 8, %s30
          %s390 = ssub.s32 1024, 1024
          %391 = vsyncadd %s384, %s390
          %s392 = smul.addr %s29, 16
          %s393 = sadd.s32 %s388, %s392
          %s394 = smul.addr %s393, 128
          %s395 = scalar_lea.hbm %s2, %s394
          %s396 = sshll.u32 %s387, 4
          %s397 = int_to_ptr.vmem [resolvable:$true] %s396
          %402 = dma.hbm_to_vmem [thread:$0]  %s395, 1024, %s397, %s384, 128, 128, 8
        $region36: #{tpu_custom_call.1} parent=23 // pred_fallthru
          _
        // Predicated region
        $region37: #{tpu_custom_call.1} parent=23 // pred_check
          %p403 = pneg %p140
        $region38: #{tpu_custom_call.1} parent=23 // pred_check_branch
          %405 = sbr.rel (%p403) target = $region40
        $region39: #{tpu_custom_call.1} parent=23 // pred_region
          %s406 = smul.u32 8, %s30
          %p407 = scmp.lt.s32.totalorder %s29, 1
          %s408 = scalar_select %p407, %s29, 1
          %p409 = scmp.lt.s32.totalorder %s406, 15
          %s410 = scalar_select %p409, %s406, 15
          %s411 = smul.addr %s408, 16
          %s412 = sadd.s32 %s410, %s411
          %s413 = smul.addr %s412, 8
          %s414 = scalar_lea.vmem %s3, %s413
          %s415 = smul.u32 8, %s30
        $region40: #{tpu_custom_call.1} parent=23 // pred_fallthru
          _
        // Predicated region
        $region41: #{tpu_custom_call.1} parent=23 // pred_check
          %p416 = pneg %p166
        $region42: #{tpu_custom_call.1} parent=23 // pred_check_branch
          %418 = sbr.rel (%p416) target = $region44
        $region43: #{tpu_custom_call.1} parent=23 // pred_region
          %p419 = scmp.lt.s32.totalorder %s29, 1
          %s420 = scalar_select %p419, %s29, 1
          %s421 = smul.addr %s420, 64
          %s422 = smul.addr %s421, 4
          %s423 = scalar_lea.vmem %s4, %s422
        $region44: #{tpu_custom_call.1} parent=23 // pred_fallthru
          _
        // Predicated region
        $region45: #{tpu_custom_call.1} parent=23 // pred_check
          %p424 = pneg %p192
        $region46: #{tpu_custom_call.1} parent=23 // pred_check_branch
          %426 = sbr.rel (%p424) target = $region48
        $region47: #{tpu_custom_call.1} parent=23 // pred_region
          %p427 = scmp.lt.s32.totalorder %s29, 1
          %s428 = scalar_select %p427, %s29, 1
          %s429 = smul.addr %s428, 4
          %s430 = smul.addr %s429, 4
          %s431 = scalar_lea.vmem %s5, %s430
        $region48: #{tpu_custom_call.1} parent=23 // pred_fallthru
          _
        // Predicated region
        $region49: #{tpu_custom_call.1} parent=23 // pred_check
          %p432 = pneg %p218
        $region50: #{tpu_custom_call.1} parent=23 // pred_check_branch
          %434 = sbr.rel (%p432) target = $region52
        $region51: #{tpu_custom_call.1} parent=23 // pred_region
          %s435 = sand.u32 %s22, 1
          %s436 = scalar_lea.sflag [#allocation5], %s435
          %s437 = sand.u32 %s208, 1
          %s438 = smul.addr %s437, 128
          %s439 = scalar_lea.vmem [#allocation6], %s438
          %s441 = ssub.s32 2048, 2048
          %442 = vsyncadd %s436, %s441
          %s443 = smul.addr %s29, 32
          %s444 = smul.addr %s443, 64
          %s445 = scalar_lea.hbm %s6, %s444
          %s446 = sshll.u32 %s439, 4
          %s447 = int_to_ptr.vmem [resolvable:$true] %s446
          %452 = dma.hbm_to_vmem [thread:$0]  %s445, 2048, %s447, %s436, 128, 128, 8
        $region52: #{tpu_custom_call.1} parent=23 // pred_fallthru
          _
        // Predicated region
        $region53: #{tpu_custom_call.1} parent=23 // pred_check
          %p453 = pneg %p244
        $region54: #{tpu_custom_call.1} parent=23 // pred_check_branch
          %455 = sbr.rel (%p453) target = $region56
        $region55: #{tpu_custom_call.1} parent=23 // pred_region
          %p456 = scmp.lt.s32.totalorder %s29, 1
          %s457 = scalar_select %p456, %s29, 1
          %s458 = scalar_lea.vmem %s7, %s457
        $region56: #{tpu_custom_call.1} parent=23 // pred_fallthru
          _
      $region24: #{tpu_custom_call.1} parent=5 // pred_fallthru
        _
      %p459 = scmp.le.s32.totalorder 1, %s22
      %p460 = scmp.lt.s32.totalorder %s22, 5
      %p461 = pnand %p459, %p460
      %p462 = pneg %p461
      // Predicated region
      $region57: #{tpu_custom_call.1} parent=5 // pred_check
        _
      $region58: #{tpu_custom_call.1} parent=5 // pred_check_branch
        %464 = sbr.rel (%p461) target = $region60
      $region59: #{tpu_custom_call.1} parent=5 // pred_region
        %s465 = ssub.s32 %s22, 1
        %s466 = sand.u32 %s49, 1
        %s467 = scalar_lea.sflag [#allocation3], %s466
        %s468 = sand.u32 %s49, 1
        %s469 = smul.addr %s468, 64
        %s470 = scalar_lea.vmem [#allocation2], %s469
        // Predicated region
        $region61: #{tpu_custom_call.1} parent=59 // pred_check
          %p471 = pneg %p62
        $region62: #{tpu_custom_call.1} parent=59 // pred_check_branch
          %473 = sbr.rel (%p471) target = $region64
        $region63: #{tpu_custom_call.1} parent=59 // pred_region
          %474 = dma.done %s467, 1024
        $region64: #{tpu_custom_call.1} parent=59 // pred_fallthru
          _
        %s475 = sand.u32 %s27, 1
        %s476 = scalar_lea.sflag [#allocation5], %s475
        %s477 = sand.u32 %s105, 1
        %s478 = smul.addr %s477, 64
        %s479 = scalar_lea.vmem [#allocation4], %s478
        // Predicated region
        $region65: #{tpu_custom_call.1} parent=59 // pred_check
          %p480 = pneg %p118
        $region66: #{tpu_custom_call.1} parent=59 // pred_check_branch
          %482 = sbr.rel (%p480) target = $region68
        $region67: #{tpu_custom_call.1} parent=59 // pred_region
          %483 = dma.done %s476, 1024
        $region68: #{tpu_custom_call.1} parent=59 // pred_fallthru
          _
        %s484 = sand.u32 %s27, 1
        %s485 = scalar_lea.sflag [#allocation5], %s484
        %s486 = sand.u32 %s211, 1
        %s487 = smul.addr %s486, 128
        %s488 = scalar_lea.vmem [#allocation6], %s487
        // Predicated region
        $region69: #{tpu_custom_call.1} parent=59 // pred_check
          %p489 = pneg %p224
        $region70: #{tpu_custom_call.1} parent=59 // pred_check_branch
          %491 = sbr.rel (%p489) target = $region72
        $region71: #{tpu_custom_call.1} parent=59 // pred_region
          %492 = dma.done %s485, 2048
        $region72: #{tpu_custom_call.1} parent=59 // pred_fallthru
          _
        %s493 = sand.u32 %s49, 1
        %s494 = scalar_lea.sflag [#allocation3], %s493
        %s495 = sand.u32 %s49, 1
        %s496 = smul.addr %s495, 64
        %s497 = scalar_lea.vmem [#allocation2], %s496
        %p498 = pneg %p62
        %p499 = pneg %p59
        %p500 = scmp.lt.s32.totalorder %s31, 1
        %s501 = scalar_select %p500, %s31, 1
        %p502 = scmp.lt.s32.totalorder %s32, 1
        %s503 = scalar_select %p502, %s32, 1
        %s504 = smul.addr %s503, 2
        %s505 = smul.addr %s501, 4
        %s506 = sadd.s32 %s504, %s505
        %s507 = smul.addr %s506, 8
        %s508 = scalar_lea.vmem %s1, %s507
        %p509 = pneg %p90
        %p510 = pneg %p87
        %s511 = sand.u32 %s27, 1
        %s512 = scalar_lea.sflag [#allocation5], %s511
        %s513 = sand.u32 %s105, 1
        %s514 = smul.addr %s513, 64
        %s515 = scalar_lea.vmem [#allocation4], %s514
        %p516 = pneg %p118
        %p517 = pneg %p115
        %s518 = smul.u32 8, %s32
        %p519 = scmp.lt.s32.totalorder %s31, 1
        %s520 = scalar_select %p519, %s31, 1
        %p521 = scmp.lt.s32.totalorder %s518, 15
        %s522 = scalar_select %p521, %s518, 15
        %s523 = smul.addr %s520, 16
        %s524 = sadd.s32 %s522, %s523
        %s525 = smul.addr %s524, 8
        %s526 = scalar_lea.vmem %s3, %s525
        %p527 = pneg %p146
        %p528 = pneg %p143
        %p529 = scmp.lt.s32.totalorder %s31, 1
        %s530 = scalar_select %p529, %s31, 1
        %s531 = smul.addr %s530, 64
        %s532 = smul.addr %s531, 4
        %s533 = scalar_lea.vmem %s4, %s532
        %p534 = pneg %p172
        %p535 = pneg %p169
        %p536 = scmp.lt.s32.totalorder %s31, 1
        %s537 = scalar_select %p536, %s31, 1
        %s538 = smul.addr %s537, 4
        %s539 = smul.addr %s538, 4
        %s540 = scalar_lea.vmem %s5, %s539
        %p541 = pneg %p198
        %p542 = pneg %p195
        %s543 = sand.u32 %s27, 1
        %s544 = scalar_lea.sflag [#allocation5], %s543
        %s545 = sand.u32 %s211, 1
        %s546 = smul.addr %s545, 128
        %s547 = scalar_lea.vmem [#allocation6], %s546
        %p548 = pneg %p224
        %p549 = pneg %p221
        %p550 = scmp.lt.s32.totalorder %s31, 1
        %s551 = scalar_select %p550, %s31, 1
        %s552 = scalar_lea.vmem %s7, %s551
        %p553 = pneg %p250
        %p554 = pneg %p247
        %p555 = pneg %p271
        %p556 = pneg %p268
        %p557 = pneg %p292
        %p558 = pneg %p289
        %p559 = pneg %p320
        %p560 = pneg %p317
        %s561 = smul.u32 8, %s32
        %p562 = scmp.lt.s32.totalorder %s31, 1
        %s563 = scalar_select %p562, %s31, 1
        %p564 = scmp.lt.s32.totalorder %s561, 15
        %s565 = scalar_select %p564, %s561, 15
        %s566 = smul.addr %s563, 16
        %s567 = sadd.s32 %s565, %s566
        %s568 = smul.addr %s567, 8
        %s569 = scalar_lea.vmem %s10, %s568
        %s570 = smul.u32 8, %s32
        %p571 = scmp.lt.s32.totalorder %s31, 1
        %s572 = scalar_select %p571, %s31, 1
        %p573 = scmp.lt.s32.totalorder %s32, 1
        %s574 = scalar_select %p573, %s32, 1
        %s575 = smul.addr %s574, 2
        %s576 = smul.addr %s572, 4
        %s577 = sadd.s32 %s575, %s576
        %s578 = smul.addr %s577, 8
        %s579 = scalar_lea.vmem %s1, %s578
        %s580 = smul.u32 8, %s32
        %s581 = smul.u32 8, %s32
        %p582 = scmp.lt.s32.totalorder %s31, 1
        %s583 = scalar_select %p582, %s31, 1
        %p584 = scmp.lt.s32.totalorder %s581, 15
        %s585 = scalar_select %p584, %s581, 15
        %s586 = smul.addr %s583, 16
        %s587 = sadd.s32 %s585, %s586
        %s588 = smul.addr %s587, 8
        %s589 = scalar_lea.vmem %s3, %s588
        %s590 = smul.u32 8, %s32
        %p591 = scmp.lt.s32.totalorder %s31, 1
        %s592 = scalar_select %p591, %s31, 1
        %s593 = smul.addr %s592, 64
        %s594 = smul.addr %s593, 4
        %s595 = scalar_lea.vmem %s4, %s594
        %p596 = scmp.lt.s32.totalorder %s31, 1
        %s597 = scalar_select %p596, %s31, 1
        %s598 = smul.addr %s597, 4
        %s599 = smul.addr %s598, 4
        %s600 = scalar_lea.vmem %s5, %s599
        %p601 = scmp.lt.s32.totalorder %s31, 1
        %s602 = scalar_select %p601, %s31, 1
        %s603 = scalar_lea.vmem %s7, %s602
        %s604 = smul.u32 8, %s32
        %p605 = scmp.lt.s32.totalorder %s31, 1
        %s606 = scalar_select %p605, %s31, 1
        %p607 = scmp.lt.s32.totalorder %s604, 15
        %s608 = scalar_select %p607, %s604, 15
        %s609 = smul.addr %s606, 16
        %s610 = sadd.s32 %s608, %s609
        %s611 = smul.addr %s610, 8
        %s612 = scalar_lea.vmem %s10, %s611
        %s613 = smul.u32 8, %s32
        %v615 = vld [vmem:[%s479] sm:$0xff]
        %v616 = vld [vmem:[%s479 + $0x8] sm:$0xff]
        %v617 = vld [vmem:[%s479 + $0x10] sm:$0xff]
        %v618 = vld [vmem:[%s479 + $0x18] sm:$0xff]
        %v619 = vld [vmem:[%s479 + $0x20] sm:$0xff]
        %v620 = vld [vmem:[%s479 + $0x28] sm:$0xff]
        %v621 = vld [vmem:[%s479 + $0x30] sm:$0xff]
        %v622 = vld [vmem:[%s479 + $0x38] sm:$0xff]
        %v623 = vpack.c.bf16 %v616, %v615
        %v624 = vpack.c.bf16 %v618, %v617
        %v625 = vpack.c.bf16 %v620, %v619
        %v626 = vpack.c.bf16 %v622, %v621
        %v627 = vld [vmem:[%s488] sm:$0xff]
        %v628 = vld [vmem:[%s488 + $0x8] sm:$0xff]
        %v629 = vld [vmem:[%s488 + $0x10] sm:$0xff]
        %v630 = vld [vmem:[%s488 + $0x18] sm:$0xff]
        %v631 = vld [vmem:[%s488 + $0x20] sm:$0xff]
        %v632 = vld [vmem:[%s488 + $0x28] sm:$0xff]
        %v633 = vld [vmem:[%s488 + $0x30] sm:$0xff]
        %v634 = vld [vmem:[%s488 + $0x38] sm:$0xff]
        %v635 = vld [vmem:[%s488 + $0x40] sm:$0xff]
        %v636 = vld [vmem:[%s488 + $0x48] sm:$0xff]
        %v637 = vld [vmem:[%s488 + $0x50] sm:$0xff]
        %v638 = vld [vmem:[%s488 + $0x58] sm:$0xff]
        %v639 = vld [vmem:[%s488 + $0x60] sm:$0xff]
        %v640 = vld [vmem:[%s488 + $0x68] sm:$0xff]
        %v641 = vld [vmem:[%s488 + $0x70] sm:$0xff]
        %v642 = vld [vmem:[%s488 + $0x78] sm:$0xff]
        %v659 = vunpack.c.l.b16 %v627
        %v660 = vunpack.c.h.b16 %v627
        %v661 = vunpack.c.l.b16 %v628
        %v662 = vunpack.c.h.b16 %v628
        %v663 = vunpack.c.l.b16 %v629
        %v664 = vunpack.c.h.b16 %v629
        %v665 = vunpack.c.l.b16 %v630
        %v666 = vunpack.c.h.b16 %v630
        %v667 = vunpack.c.l.b16 %v631
        %v668 = vunpack.c.h.b16 %v631
        %v669 = vunpack.c.l.b16 %v632
        %v670 = vunpack.c.h.b16 %v632
        %v671 = vunpack.c.l.b16 %v633
        %v672 = vunpack.c.h.b16 %v633
        %v673 = vunpack.c.l.b16 %v634
        %v674 = vunpack.c.h.b16 %v634
        %v675 = vunpack.c.l.b16 %v635
        %v676 = vunpack.c.h.b16 %v635
        %v677 = vunpack.c.l.b16 %v636
        %v678 = vunpack.c.h.b16 %v636
        %v679 = vunpack.c.l.b16 %v637
        %v680 = vunpack.c.h.b16 %v637
        %v681 = vunpack.c.l.b16 %v638
        %v682 = vunpack.c.h.b16 %v638
        %v683 = vunpack.c.l.b16 %v639
        %v684 = vunpack.c.h.b16 %v639
        %v685 = vunpack.c.l.b16 %v640
        %v686 = vunpack.c.h.b16 %v640
        %v687 = vunpack.c.l.b16 %v641
        %v688 = vunpack.c.h.b16 %v641
        %v689 = vunpack.c.l.b16 %v642
        %v690 = vunpack.c.h.b16 %v642
        %v691 = vpack.c.b16 %v661, %v659
        %v692 = vpack.c.b16 %v662, %v660
        %v693 = vpack.c.b16 %v665, %v663
        %v694 = vpack.c.b16 %v666, %v664
        %v695 = vpack.c.b16 %v669, %v667
        %v696 = vpack.c.b16 %v670, %v668
        %v697 = vpack.c.b16 %v673, %v671
        %v698 = vpack.c.b16 %v674, %v672
        %v699 = vpack.c.b16 %v677, %v675
        %v700 = vpack.c.b16 %v678, %v676
        %v701 = vpack.c.b16 %v681, %v679
        %v702 = vpack.c.b16 %v682, %v680
        %v703 = vpack.c.b16 %v685, %v683
        %v704 = vpack.c.b16 %v686, %v684
        %v705 = vpack.c.b16 %v689, %v687
        %v706 = vpack.c.b16 %v690, %v688
        %723 = vmatprep.subr.bf16.mxu0 %v692
        %724 = vmatpush1.bf16.msra.mxu0 %v691
        %725 = vmatprep.subr.bf16.mxu0 %v694
        %726 = vmatpush1.bf16.msra.mxu0 %v693
        %727 = vmatprep.subr.bf16.mxu0 %v696
        %728 = vmatpush1.bf16.msra.mxu0 %v695
        %729 = vmatprep.subr.bf16.mxu0 %v698
        %730 = vmatpush1.bf16.msra.mxu0 %v697
        %731 = vmatprep.subr.bf16.mxu0 %v700
        %732 = vmatpush1.bf16.msra.mxu0 %v699
        %733 = vmatprep.subr.bf16.mxu0 %v702
        %734 = vmatpush1.bf16.msra.mxu0 %v701
        %735 = vmatprep.subr.bf16.mxu0 %v704
        %736 = vmatpush1.bf16.msra.mxu0 %v703
        %737 = vmatprep.subr.bf16.mxu0 %v706
        %738 = vmatpush1.bf16.msra.mxu0 %v705
        %739 = vmatprep.subr.bf16.mxu0 0
        %740 = vmatpush1.bf16.msra.mxu0 0
        %741 = vmatprep.subr.bf16.mxu0 0
        %742 = vmatpush1.bf16.msra.mxu0 0
        %743 = vmatprep.subr.bf16.mxu0 0
        %744 = vmatpush1.bf16.msra.mxu0 0
        %745 = vmatprep.subr.bf16.mxu0 0
        %746 = vmatpush1.bf16.msra.mxu0 0
        %747 = vmatprep.subr.bf16.mxu0 0
        %748 = vmatpush1.bf16.msra.mxu0 0
        %749 = vmatprep.subr.bf16.mxu0 0
        %750 = vmatpush1.bf16.msra.mxu0 0
        %751 = vmatprep.subr.bf16.mxu0 0
        %752 = vmatpush1.bf16.msra.mxu0 0
        %753 = vmatprep.subr.bf16.mxu0 0
        %754 = vmatpush1.bf16.msra.mxu0 0
        %755 = vmatprep.mubr.bf16.mxu0 0
        %756 = vmatmul.mubr.bf16.gmra.mrb[0].mxu0 %v623
        %v757 = vpop.f32.mrb[0].mxu0
        %v758 = vadd.f32 0.0, %v757
        %v759 = vpop.f32.mrb[0].mxu0
        %v760 = vadd.f32 0.0, %v759
        %v761 = vpop.f32.mrb[0].mxu0
        %v762 = vadd.f32 0.0, %v761
        %v763 = vpop.f32.mrb[0].mxu0
        %v764 = vadd.f32 0.0, %v763
        %765 = vmatprep.mubr.bf16.mxu0 0
        %766 = vmatmul.mubr.bf16.gmra.mrb[0].mxu0 %v624
        %v767 = vpop.f32.mrb[0].mxu0
        %v768 = vadd.f32 0.0, %v767
        %v769 = vpop.f32.mrb[0].mxu0
        %v770 = vadd.f32 0.0, %v769
        %v771 = vpop.f32.mrb[0].mxu0
        %v772 = vadd.f32 0.0, %v771
        %v773 = vpop.f32.mrb[0].mxu0
        %v774 = vadd.f32 0.0, %v773
        %775 = vmatprep.mubr.bf16.mxu0 0
        %776 = vmatmul.mubr.bf16.gmra.mrb[0].mxu0 %v625
        %v777 = vpop.f32.mrb[0].mxu0
        %v778 = vadd.f32 0.0, %v777
        %v779 = vpop.f32.mrb[0].mxu0
        %v780 = vadd.f32 0.0, %v779
        %v781 = vpop.f32.mrb[0].mxu0
        %v782 = vadd.f32 0.0, %v781
        %v783 = vpop.f32.mrb[0].mxu0
        %v784 = vadd.f32 0.0, %v783
        %785 = vmatprep.mubr.bf16.mxu0 0
        %786 = vmatmul.mubr.bf16.gmra.mrb[0].mxu0 %v626
        %v787 = vpop.f32.mrb[0].mxu0
        %v788 = vadd.f32 0.0, %v787
        %v789 = vpop.f32.mrb[0].mxu0
        %v790 = vadd.f32 0.0, %v789
        %v791 = vpop.f32.mrb[0].mxu0
        %v792 = vadd.f32 0.0, %v791
        %v793 = vpop.f32.mrb[0].mxu0
        %v794 = vadd.f32 0.0, %v793
        %795 = vdwg.mxu0
        %v796 = vld [vmem:[%s579] sm:$0xff]
        %v797 = vld [vmem:[%s579 + $0x8] sm:$0xff]
        %v798 = vpack.c.bf16 %v796, %v796
        %v799 = vpack.c.bf16 %v797, %v797
        %v800 = vld [vmem:[%s595] sm:$0xff]
        %v801 = vld [vmem:[%s595 + $0x8] sm:$0xff]
        %v802 = vld [vmem:[%s595 + $0x10] sm:$0xff]
        %v803 = vld [vmem:[%s595 + $0x18] sm:$0xff]
        %v804 = vld [vmem:[%s595 + $0x20] sm:$0xff]
        %v805 = vld [vmem:[%s595 + $0x28] sm:$0xff]
        %v806 = vld [vmem:[%s595 + $0x30] sm:$0xff]
        %v807 = vld [vmem:[%s595 + $0x38] sm:$0xff]
        %v808 = vld [vmem:[%s595 + $0x40] sm:$0xff]
        %v809 = vld [vmem:[%s595 + $0x48] sm:$0xff]
        %v810 = vld [vmem:[%s595 + $0x50] sm:$0xff]
        %v811 = vld [vmem:[%s595 + $0x58] sm:$0xff]
        %v812 = vld [vmem:[%s595 + $0x60] sm:$0xff]
        %v813 = vld [vmem:[%s595 + $0x68] sm:$0xff]
        %v814 = vld [vmem:[%s595 + $0x70] sm:$0xff]
        %v815 = vld [vmem:[%s595 + $0x78] sm:$0xff]
        %v816 = vld [vmem:[%s595 + $0x80] sm:$0xff]
        %v817 = vld [vmem:[%s595 + $0x88] sm:$0xff]
        %v818 = vld [vmem:[%s595 + $0x90] sm:$0xff]
        %v819 = vld [vmem:[%s595 + $0x98] sm:$0xff]
        %v820 = vld [vmem:[%s595 + $0xa0] sm:$0xff]
        %v821 = vld [vmem:[%s595 + $0xa8] sm:$0xff]
        %v822 = vld [vmem:[%s595 + $0xb0] sm:$0xff]
        %v823 = vld [vmem:[%s595 + $0xb8] sm:$0xff]
        %v824 = vld [vmem:[%s595 + $0xc0] sm:$0xff]
        %v825 = vld [vmem:[%s595 + $0xc8] sm:$0xff]
        %v826 = vld [vmem:[%s595 + $0xd0] sm:$0xff]
        %v827 = vld [vmem:[%s595 + $0xd8] sm:$0xff]
        %v828 = vld [vmem:[%s595 + $0xe0] sm:$0xff]
        %v829 = vld [vmem:[%s595 + $0xe8] sm:$0xff]
        %v830 = vld [vmem:[%s595 + $0xf0] sm:$0xff]
        %v831 = vld [vmem:[%s595 + $0xf8] sm:$0xff]
        %v864 = vunpack.c.l.b16 %v800
        %v865 = vunpack.c.h.b16 %v800
        %v866 = vunpack.c.l.b16 %v801
        %v867 = vunpack.c.h.b16 %v801
        %v868 = vunpack.c.l.b16 %v802
        %v869 = vunpack.c.h.b16 %v802
        %v870 = vunpack.c.l.b16 %v803
        %v871 = vunpack.c.h.b16 %v803
        %v872 = vunpack.c.l.b16 %v804
        %v873 = vunpack.c.h.b16 %v804
        %v874 = vunpack.c.l.b16 %v805
        %v875 = vunpack.c.h.b16 %v805
        %v876 = vunpack.c.l.b16 %v806
        %v877 = vunpack.c.h.b16 %v806
        %v878 = vunpack.c.l.b16 %v807
        %v879 = vunpack.c.h.b16 %v807
        %v880 = vunpack.c.l.b16 %v808
        %v881 = vunpack.c.h.b16 %v808
        %v882 = vunpack.c.l.b16 %v809
        %v883 = vunpack.c.h.b16 %v809
        %v884 = vunpack.c.l.b16 %v810
        %v885 = vunpack.c.h.b16 %v810
        %v886 = vunpack.c.l.b16 %v811
        %v887 = vunpack.c.h.b16 %v811
        %v888 = vunpack.c.l.b16 %v812
        %v889 = vunpack.c.h.b16 %v812
        %v890 = vunpack.c.l.b16 %v813
        %v891 = vunpack.c.h.b16 %v813
        %v892 = vunpack.c.l.b16 %v814
        %v893 = vunpack.c.h.b16 %v814
        %v894 = vunpack.c.l.b16 %v815
        %v895 = vunpack.c.h.b16 %v815
        %v896 = vunpack.c.l.b16 %v816
        %v897 = vunpack.c.h.b16 %v816
        %v898 = vunpack.c.l.b16 %v817
        %v899 = vunpack.c.h.b16 %v817
        %v900 = vunpack.c.l.b16 %v818
        %v901 = vunpack.c.h.b16 %v818
        %v902 = vunpack.c.l.b16 %v819
        %v903 = vunpack.c.h.b16 %v819
        %v904 = vunpack.c.l.b16 %v820
        %v905 = vunpack.c.h.b16 %v820
        %v906 = vunpack.c.l.b16 %v821
        %v907 = vunpack.c.h.b16 %v821
        %v908 = vunpack.c.l.b16 %v822
        %v909 = vunpack.c.h.b16 %v822
        %v910 = vunpack.c.l.b16 %v823
        %v911 = vunpack.c.h.b16 %v823
        %v912 = vunpack.c.l.b16 %v824
        %v913 = vunpack.c.h.b16 %v824
        %v914 = vunpack.c.l.b16 %v825
        %v915 = vunpack.c.h.b16 %v825
        %v916 = vunpack.c.l.b16 %v826
        %v917 = vunpack.c.h.b16 %v826
        %v918 = vunpack.c.l.b16 %v827
        %v919 = vunpack.c.h.b16 %v827
        %v920 = vunpack.c.l.b16 %v828
        %v921 = vunpack.c.h.b16 %v828
        %v922 = vunpack.c.l.b16 %v829
        %v923 = vunpack.c.h.b16 %v829
        %v924 = vunpack.c.l.b16 %v830
        %v925 = vunpack.c.h.b16 %v830
        %v926 = vunpack.c.l.b16 %v831
        %v927 = vunpack.c.h.b16 %v831
        %v928 = vpack.c.b16 %v866, %v864
        %v929 = vpack.c.b16 %v867, %v865
        %v930 = vpack.c.b16 %v870, %v868
        %v931 = vpack.c.b16 %v871, %v869
        %v932 = vpack.c.b16 %v874, %v872
        %v933 = vpack.c.b16 %v875, %v873
        %v934 = vpack.c.b16 %v878, %v876
        %v935 = vpack.c.b16 %v879, %v877
        %v936 = vpack.c.b16 %v882, %v880
        %v937 = vpack.c.b16 %v883, %v881
        %v938 = vpack.c.b16 %v886, %v884
        %v939 = vpack.c.b16 %v887, %v885
        %v940 = vpack.c.b16 %v890, %v888
        %v941 = vpack.c.b16 %v891, %v889
        %v942 = vpack.c.b16 %v894, %v892
        %v943 = vpack.c.b16 %v895, %v893
        %v944 = vpack.c.b16 %v898, %v896
        %v945 = vpack.c.b16 %v899, %v897
        %v946 = vpack.c.b16 %v902, %v900
        %v947 = vpack.c.b16 %v903, %v901
        %v948 = vpack.c.b16 %v906, %v904
        %v949 = vpack.c.b16 %v907, %v905
        %v950 = vpack.c.b16 %v910, %v908
        %v951 = vpack.c.b16 %v911, %v909
        %v952 = vpack.c.b16 %v914, %v912
        %v953 = vpack.c.b16 %v915, %v913
        %v954 = vpack.c.b16 %v918, %v916
        %v955 = vpack.c.b16 %v919, %v917
        %v956 = vpack.c.b16 %v922, %v920
        %v957 = vpack.c.b16 %v923, %v921
        %v958 = vpack.c.b16 %v926, %v924
        %v959 = vpack.c.b16 %v927, %v925
        %992 = vmatprep.subr.bf16.mxu0 %v929
        %993 = vmatpush1.bf16.msra.mxu0 %v928
        %994 = vmatprep.subr.bf16.mxu0 %v931
        %995 = vmatpush1.bf16.msra.mxu0 %v930
        %996 = vmatprep.subr.bf16.mxu0 %v933
        %997 = vmatpush1.bf16.msra.mxu0 %v932
        %998 = vmatprep.subr.bf16.mxu0 %v935
        %999 = vmatpush1.bf16.msra.mxu0 %v934
        %1000 = vmatprep.subr.bf16.mxu0 %v937
        %1001 = vmatpush1.bf16.msra.mxu0 %v936
        %1002 = vmatprep.subr.bf16.mxu0 %v939
        %1003 = vmatpush1.bf16.msra.mxu0 %v938
        %1004 = vmatprep.subr.bf16.mxu0 %v941
        %1005 = vmatpush1.bf16.msra.mxu0 %v940
        %1006 = vmatprep.subr.bf16.mxu0 %v943
        %1007 = vmatpush1.bf16.msra.mxu0 %v942
        %1008 = vmatprep.subr.bf16.mxu0 %v945
        %1009 = vmatpush1.bf16.msra.mxu0 %v944
        %1010 = vmatprep.subr.bf16.mxu0 %v947
        %1011 = vmatpush1.bf16.msra.mxu0 %v946
        %1012 = vmatprep.subr.bf16.mxu0 %v949
        %1013 = vmatpush1.bf16.msra.mxu0 %v948
        %1014 = vmatprep.subr.bf16.mxu0 %v951
        %1015 = vmatpush1.bf16.msra.mxu0 %v950
        %1016 = vmatprep.subr.bf16.mxu0 %v953
        %1017 = vmatpush1.bf16.msra.mxu0 %v952
        %1018 = vmatprep.subr.bf16.mxu0 %v955
        %1019 = vmatpush1.bf16.msra.mxu0 %v954
        %1020 = vmatprep.subr.bf16.mxu0 %v957
        %1021 = vmatpush1.bf16.msra.mxu0 %v956
        %1022 = vmatprep.subr.bf16.mxu0 %v959
        %1023 = vmatpush1.bf16.msra.mxu0 %v958
        %1024 = vmatprep.mubr.bf16.mxu0 %v799
        %1025 = vmatmul.mubr.bf16.gmra.mrb[0].mxu0 %v798
        %v1026 = vpop.f32.mrb[0].mxu0
        %v1027 = vadd.f32 0.0, %v1026
        %v1028 = vpop.f32.mrb[0].mxu0
        %v1029 = vadd.f32 0.0, %v1028
        %v1030 = vpop.f32.mrb[0].mxu0
        %v1031 = vpop.f32.mrb[0].mxu0
        %1032 = vdwg.mxu0
        %v1033 = vld [vmem:[%s470] sm:$0xff]
        %v1034 = vld [vmem:[%s470 + $0x8] sm:$0xff]
        %v1035 = vld [vmem:[%s470 + $0x10] sm:$0xff]
        %v1036 = vld [vmem:[%s470 + $0x18] sm:$0xff]
        %v1037 = vld [vmem:[%s470 + $0x20] sm:$0xff]
        %v1038 = vld [vmem:[%s470 + $0x28] sm:$0xff]
        %v1039 = vld [vmem:[%s470 + $0x30] sm:$0xff]
        %v1040 = vld [vmem:[%s470 + $0x38] sm:$0xff]
        %v1041 = vpack.c.bf16 %v1034, %v1033
        %v1042 = vpack.c.bf16 %v1036, %v1035
        %v1043 = vpack.c.bf16 %v1038, %v1037
        %v1044 = vpack.c.bf16 %v1040, %v1039
        %v1045 = vld [vmem:[%s600] sm:$0xf]
        %v1046 = vld [vmem:[%s600 + $0x4] sm:$0xf]
        %v1047 = vld [vmem:[%s600 + $0x8] sm:$0xf]
        %v1048 = vld [vmem:[%s600 + $0xc] sm:$0xf]
        %v1049 = vld [vmem:[%s603] sm:$0x1]
        %v1051 = vlaneseq
        %v1052 = vshrl.u32 %v1051, 7
        %v1053 = vsub.s32 0, %v1052
        %v1054 = vrot.slane %v1049, %v1053
        %v1060 = vunpack.c.l.b16 %v1045
        %v1061 = vunpack.c.l.b16 %v1046
        %v1062 = vunpack.c.l.b16 %v1047
        %v1063 = vunpack.c.l.b16 %v1048
        %v1064 = vpack.c.b16 %v1061, %v1060
        %v1065 = vpack.c.b16 %v1063, %v1062
        %vm1068 = vcmask 261120
        %v1070 = vsel %vm1068, %v1041, 0
        %v1073 = vsel %vm1068, %v1042, 0
        %v1076 = vsel %vm1068, %v1043, 0
        %v1079 = vsel %vm1068, %v1044, 0
        %1081 = vmatprep.subr.bf16.mxu0 0
        %1082 = vmatpush1.bf16.msra.mxu0 %v1064
        %1083 = vmatprep.subr.bf16.mxu0 0
        %1084 = vmatpush1.bf16.msra.mxu0 %v1065
        %1085 = vmatprep.subr.bf16.mxu0 0
        %1086 = vmatpush1.bf16.msra.mxu0 0
        %1087 = vmatprep.subr.bf16.mxu0 0
        %1088 = vmatpush1.bf16.msra.mxu0 0
        %1089 = vmatprep.subr.bf16.mxu0 0
        %1090 = vmatpush1.bf16.msra.mxu0 0
        %1091 = vmatprep.subr.bf16.mxu0 0
        %1092 = vmatpush1.bf16.msra.mxu0 0
        %1093 = vmatprep.subr.bf16.mxu0 0
        %1094 = vmatpush1.bf16.msra.mxu0 0
        %1095 = vmatprep.subr.bf16.mxu0 0
        %1096 = vmatpush1.bf16.msra.mxu0 0
        %1097 = vmatprep.subr.bf16.mxu0 0
        %1098 = vmatpush1.bf16.msra.mxu0 0
        %1099 = vmatprep.subr.bf16.mxu0 0
        %1100 = vmatpush1.bf16.msra.mxu0 0
        %1101 = vmatprep.subr.bf16.mxu0 0
        %1102 = vmatpush1.bf16.msra.mxu0 0
        %1103 = vmatprep.subr.bf16.mxu0 0
        %1104 = vmatpush1.bf16.msra.mxu0 0
        %1105 = vmatprep.subr.bf16.mxu0 0
        %1106 = vmatpush1.bf16.msra.mxu0 0
        %1107 = vmatprep.subr.bf16.mxu0 0
        %1108 = vmatpush1.bf16.msra.mxu0 0
        %1109 = vmatprep.subr.bf16.mxu0 0
        %1110 = vmatpush1.bf16.msra.mxu0 0
        %1111 = vmatprep.subr.bf16.mxu0 0
        %1112 = vmatpush1.bf16.msra.mxu0 0
        %1113 = vmatprep.mubr.bf16.mxu0 0
        %1114 = vmatmul.mubr.bf16.gmra.mrb[0].mxu0 %v1070
        %v1115 = vpop.f32.mrb[0].mxu0
        %v1116 = vadd.f32 %v1054, %v1115
        %v1117 = vpop.f32.mrb[0].mxu0
        %v1118 = vpop.f32.mrb[0].mxu0
        %v1119 = vadd.f32 %v1054, %v1118
        %v1120 = vpop.f32.mrb[0].mxu0
        %1121 = vmatprep.mubr.bf16.mxu0 0
        %1122 = vmatmul.mubr.bf16.gmra.mrb[0].mxu0 %v1073
        %v1123 = vpop.f32.mrb[0].mxu0
        %v1124 = vadd.f32 %v1054, %v1123
        %v1125 = vpop.f32.mrb[0].mxu0
        %v1126 = vpop.f32.mrb[0].mxu0
        %v1127 = vadd.f32 %v1054, %v1126
        %v1128 = vpop.f32.mrb[0].mxu0
        %1129 = vmatprep.mubr.bf16.mxu0 0
        %1130 = vmatmul.mubr.bf16.gmra.mrb[0].mxu0 %v1076
        %v1131 = vpop.f32.mrb[0].mxu0
        %v1132 = vadd.f32 %v1054, %v1131
        %v1133 = vpop.f32.mrb[0].mxu0
        %v1134 = vpop.f32.mrb[0].mxu0
        %v1135 = vadd.f32 %v1054, %v1134
        %v1136 = vpop.f32.mrb[0].mxu0
        %1137 = vmatprep.mubr.bf16.mxu0 0
        %1138 = vmatmul.mubr.bf16.gmra.mrb[0].mxu0 %v1079
        %v1139 = vpop.f32.mrb[0].mxu0
        %v1140 = vadd.f32 %v1054, %v1139
        %v1141 = vpop.f32.mrb[0].mxu0
        %v1142 = vpop.f32.mrb[0].mxu0
        %v1143 = vadd.f32 %v1054, %v1142
        %v1144 = vpop.f32.mrb[0].mxu0
        %1145 = vdwg.mxu0
        %v1148 = vcombine.low %v1027, %v1029
        %v1149 = vcombine.high %v1027, %v1029
        %v1151 = vunpack.c.l.s4 1966171168
        %v1152 = vunpack.c.0.s8 %v1151
        %v1153 = vlaneseq
        %v1154 = vshrl.u32 %v1153, 7
        %v1155 = vsub.s32 %v1152, %v1154
        %v1156 = vrot.slane %v1148, %v1155
        %v1158 = vunpack.c.l.s4 1966171168
        %v1159 = vunpack.c.0.s8 %v1158
        %v1160 = vlaneseq
        %v1161 = vshrl.u32 %v1160, 7
        %v1162 = vsub.s32 %v1159, %v1161
        %v1163 = vrot.slane %v1149, %v1162
        %v1164 = vcombine.high %v1156, %v1156
        %v1165 = vcombine.high %v1163, %v1163
        %v1167 = vunpack.c.l.s4 1966171168
        %v1168 = vunpack.c.0.s8 %v1167
        %v1169 = vlaneseq
        %v1170 = vshrl.u32 %v1169, 7
        %v1171 = vsub.s32 %v1168, %v1170
        %v1172 = vrot.slane %v1156, %v1171
        %v1174 = vunpack.c.l.s4 1966171168
        %v1175 = vunpack.c.0.s8 %v1174
        %v1176 = vlaneseq
        %v1177 = vshrl.u32 %v1176, 7
        %v1178 = vsub.s32 %v1175, %v1177
        %v1179 = vrot.slane %v1163, %v1178
        %v1181 = vunpack.c.l.s4 1966171168
        %v1182 = vunpack.c.0.s8 %v1181
        %v1183 = vlaneseq
        %v1184 = vshrl.u32 %v1183, 7
        %v1185 = vsub.s32 %v1182, %v1184
        %v1186 = vrot.slane %v1164, %v1185
        %v1188 = vunpack.c.l.s4 1966171168
        %v1189 = vunpack.c.0.s8 %v1188
        %v1190 = vlaneseq
        %v1191 = vshrl.u32 %v1190, 7
        %v1192 = vsub.s32 %v1189, %v1191
        %v1193 = vrot.slane %v1165, %v1192
        %v1194 = vcombine.high %v1172, %v1172
        %v1195 = vcombine.high %v1179, %v1179
        %v1196 = vcombine.high %v1186, %v1186
        %v1197 = vcombine.high %v1193, %v1193
        %v1198 = vlaneseq
        %v1199 = vshrl.u32 %v1198, 7
        %v1200 = vsub.s32 0, %v1199
        %v1201 = vrot.slane %v1172, %v1200
        %v1202 = vlaneseq
        %v1203 = vshrl.u32 %v1202, 7
        %v1204 = vsub.s32 1, %v1203
        %v1205 = vrot.slane %v1172, %v1204
        %v1206 = vlaneseq
        %v1207 = vshrl.u32 %v1206, 7
        %v1208 = vsub.s32 0, %v1207
        %v1209 = vrot.slane %v1186, %v1208
        %v1210 = vlaneseq
        %v1211 = vshrl.u32 %v1210, 7
        %v1212 = vsub.s32 1, %v1211
        %v1213 = vrot.slane %v1186, %v1212
        %v1214 = vlaneseq
        %v1215 = vshrl.u32 %v1214, 7
        %v1216 = vsub.s32 0, %v1215
        %v1217 = vrot.slane %v1194, %v1216
        %v1218 = vlaneseq
        %v1219 = vshrl.u32 %v1218, 7
        %v1220 = vsub.s32 1, %v1219
        %v1221 = vrot.slane %v1194, %v1220
        %v1222 = vlaneseq
        %v1223 = vshrl.u32 %v1222, 7
        %v1224 = vsub.s32 0, %v1223
        %v1225 = vrot.slane %v1196, %v1224
        %v1226 = vlaneseq
        %v1227 = vshrl.u32 %v1226, 7
        %v1228 = vsub.s32 1, %v1227
        %v1229 = vrot.slane %v1196, %v1228
        %v1230 = vlaneseq
        %v1231 = vshrl.u32 %v1230, 7
        %v1232 = vsub.s32 0, %v1231
        %v1233 = vrot.slane %v1179, %v1232
        %v1234 = vlaneseq
        %v1235 = vshrl.u32 %v1234, 7
        %v1236 = vsub.s32 1, %v1235
        %v1237 = vrot.slane %v1179, %v1236
        %v1238 = vlaneseq
        %v1239 = vshrl.u32 %v1238, 7
        %v1240 = vsub.s32 0, %v1239
        %v1241 = vrot.slane %v1193, %v1240
        %v1242 = vlaneseq
        %v1243 = vshrl.u32 %v1242, 7
        %v1244 = vsub.s32 1, %v1243
        %v1245 = vrot.slane %v1193, %v1244
        %v1246 = vlaneseq
        %v1247 = vshrl.u32 %v1246, 7
        %v1248 = vsub.s32 0, %v1247
        %v1249 = vrot.slane %v1195, %v1248
        %v1250 = vlaneseq
        %v1251 = vshrl.u32 %v1250, 7
        %v1252 = vsub.s32 1, %v1251
        %v1253 = vrot.slane %v1195, %v1252
        %v1254 = vlaneseq
        %v1255 = vshrl.u32 %v1254, 7
        %v1256 = vsub.s32 0, %v1255
        %v1257 = vrot.slane %v1197, %v1256
        %v1258 = vlaneseq
        %v1259 = vshrl.u32 %v1258, 7
        %v1260 = vsub.s32 1, %v1259
        %v1261 = vrot.slane %v1197, %v1260
        %v1278 = vadd.f32 %v758, %v1201
        %v1279 = vadd.f32 %v760, %v1205
        %v1280 = vadd.f32 %v762, %v1209
        %v1281 = vadd.f32 %v764, %v1213
        %v1282 = vadd.f32 %v768, %v1217
        %v1283 = vadd.f32 %v770, %v1221
        %v1284 = vadd.f32 %v772, %v1225
        %v1285 = vadd.f32 %v774, %v1229
        %v1286 = vadd.f32 %v778, %v1233
        %v1287 = vadd.f32 %v780, %v1237
        %v1288 = vadd.f32 %v782, %v1241
        %v1289 = vadd.f32 %v784, %v1245
        %v1290 = vadd.f32 %v788, %v1249
        %v1291 = vadd.f32 %v790, %v1253
        %v1292 = vadd.f32 %v792, %v1257
        %v1293 = vadd.f32 %v794, %v1261
        %v1294 = vmax.f32 %v1278, 0.0
        %v1295 = vmax.f32 %v1279, 0.0
        %v1296 = vmax.f32 %v1280, 0.0
        %v1297 = vmax.f32 %v1281, 0.0
        %v1298 = vmax.f32 %v1282, 0.0
        %v1299 = vmax.f32 %v1283, 0.0
        %v1300 = vmax.f32 %v1284, 0.0
        %v1301 = vmax.f32 %v1285, 0.0
        %v1302 = vmax.f32 %v1286, 0.0
        %v1303 = vmax.f32 %v1287, 0.0
        %v1304 = vmax.f32 %v1288, 0.0
        %v1305 = vmax.f32 %v1289, 0.0
        %v1306 = vmax.f32 %v1290, 0.0
        %v1307 = vmax.f32 %v1291, 0.0
        %v1308 = vmax.f32 %v1292, 0.0
        %v1309 = vmax.f32 %v1293, 0.0
        %v1310 = vld [vmem:[%s589] sm:$0xff]
        %v1311 = vld [vmem:[%s589 + $0x8] sm:$0xff]
        %v1312 = vld [vmem:[%s589 + $0x10] sm:$0xff]
        %v1313 = vld [vmem:[%s589 + $0x18] sm:$0xff]
        %v1314 = vld [vmem:[%s589 + $0x20] sm:$0xff]
        %v1315 = vld [vmem:[%s589 + $0x28] sm:$0xff]
        %v1316 = vld [vmem:[%s589 + $0x30] sm:$0xff]
        %v1317 = vld [vmem:[%s589 + $0x38] sm:$0xff]
        %vm1318 = vcmask 64512
        %v1319 = vsel %vm1318, %v1310, 0.0
        %1320 = vadd.xlane.f32.xlu0 %v1319
        %v1321 = vpop.xlane.xlu0 %1320
        %v1322 = vsel %vm1318, %v1311, 0.0
        %1323 = vadd.xlane.f32.xlu0 %v1322
        %v1324 = vpop.xlane.xlu0 %1323
        %v1325 = vsel %vm1318, %v1312, 0.0
        %1326 = vadd.xlane.f32.xlu0 %v1325
        %v1327 = vpop.xlane.xlu0 %1326
        %v1328 = vsel %vm1318, %v1313, 0.0
        %1329 = vadd.xlane.f32.xlu0 %v1328
        %v1330 = vpop.xlane.xlu0 %1329
        %v1331 = vsel %vm1318, %v1314, 0.0
        %1332 = vadd.xlane.f32.xlu0 %v1331
        %v1333 = vpop.xlane.xlu0 %1332
        %v1334 = vsel %vm1318, %v1315, 0.0
        %1335 = vadd.xlane.f32.xlu0 %v1334
        %v1336 = vpop.xlane.xlu0 %1335
        %v1337 = vsel %vm1318, %v1316, 0.0
        %1338 = vadd.xlane.f32.xlu0 %v1337
        %v1339 = vpop.xlane.xlu0 %1338
        %v1340 = vsel %vm1318, %v1317, 0.0
        %1341 = vadd.xlane.f32.xlu0 %v1340
        %v1342 = vpop.xlane.xlu0 %1341
        %v1343 = vmax.f32 %v1321, 1.0
        %v1344 = vmax.f32 %v1324, 1.0
        %v1345 = vmax.f32 %v1327, 1.0
        %v1346 = vmax.f32 %v1330, 1.0
        %v1347 = vmax.f32 %v1333, 1.0
        %v1348 = vmax.f32 %v1336, 1.0
        %v1349 = vmax.f32 %v1339, 1.0
        %v1350 = vmax.f32 %v1342, 1.0
        %v1351 = vrcp.pop %v1343
        %v1352 = vrcp.pop %v1344
        %v1353 = vrcp.pop %v1345
        %v1354 = vrcp.pop %v1346
        %v1355 = vrcp.pop %v1347
        %v1356 = vrcp.pop %v1348
        %v1357 = vrcp.pop %v1349
        %v1358 = vrcp.pop %v1350
        %v1359 = vmul.f32 %v1310, %v1351
        %v1360 = vmul.f32 %v1311, %v1352
        %v1361 = vmul.f32 %v1312, %v1353
        %v1362 = vmul.f32 %v1313, %v1354
        %v1363 = vmul.f32 %v1314, %v1355
        %v1364 = vmul.f32 %v1315, %v1356
        %v1365 = vmul.f32 %v1316, %v1357
        %v1366 = vmul.f32 %v1317, %v1358
        %v1367 = vld [vmem:[%s8] sm:$0xff]
        %v1368 = vld [vmem:[%s8 + $0x8] sm:$0xff]
        %v1370 = vsel %vm1318, %v1359, 0
        %v1373 = vsel %vm1318, %v1360, 0
        %v1376 = vsel %vm1318, %v1361, 0
        %v1379 = vsel %vm1318, %v1362, 0
        %v1382 = vsel %vm1318, %v1363, 0
        %v1385 = vsel %vm1318, %v1364, 0
        %v1388 = vsel %vm1318, %v1365, 0
        %v1391 = vsel %vm1318, %v1366, 0
        %1393 = vmatprep.subr.mxu0 %v1368
        %1394 = vmatpush1.msra.mxu0 %v1367
        %1395 = vmatprep.subr.mxu0 0.0
        %1396 = vmatpush1.msra.mxu0 0.0
        %1397 = vmatprep.subr.mxu0 0.0
        %1398 = vmatpush1.msra.mxu0 0.0
        %1399 = vmatprep.subr.mxu0 0.0
        %1400 = vmatpush1.msra.mxu0 0.0
        %1401 = vmatprep.subr.mxu0 0.0
        %1402 = vmatpush1.msra.mxu0 0.0
        %1403 = vmatprep.subr.mxu0 0.0
        %1404 = vmatpush1.msra.mxu0 0.0
        %1405 = vmatprep.subr.mxu0 0.0
        %1406 = vmatpush1.msra.mxu0 0.0
        %1407 = vmatprep.subr.mxu0 0.0
        %1408 = vmatpush1.msra.mxu0 0.0
        %1409 = vmatprep.subr.mxu0 0.0
        %1410 = vmatpush1.msra.mxu0 0.0
        %1411 = vmatprep.subr.mxu0 0.0
        %1412 = vmatpush1.msra.mxu0 0.0
        %1413 = vmatprep.subr.mxu0 0.0
        %1414 = vmatpush1.msra.mxu0 0.0
        %1415 = vmatprep.subr.mxu0 0.0
        %1416 = vmatpush1.msra.mxu0 0.0
        %1417 = vmatprep.subr.mxu0 0.0
        %1418 = vmatpush1.msra.mxu0 0.0
        %1419 = vmatprep.subr.mxu0 0.0
        %1420 = vmatpush1.msra.mxu0 0.0
        %1421 = vmatprep.subr.mxu0 0.0
        %1422 = vmatpush1.msra.mxu0 0.0
        %1423 = vmatprep.subr.mxu0 0.0
        %1424 = vmatpush1.msra.mxu0 0.0
        %1425 = vmatprep.subr.mxu0 0.0
        %1426 = vmatpush1.msra.mxu0 0.0
        %1427 = vmatprep.subr.mxu0 0.0
        %1428 = vmatpush1.msra.mxu0 0.0
        %1429 = vmatprep.subr.mxu0 0.0
        %1430 = vmatpush1.msra.mxu0 0.0
        %1431 = vmatprep.subr.mxu0 0.0
        %1432 = vmatpush1.msra.mxu0 0.0
        %1433 = vmatprep.subr.mxu0 0.0
        %1434 = vmatpush1.msra.mxu0 0.0
        %1435 = vmatprep.subr.mxu0 0.0
        %1436 = vmatpush1.msra.mxu0 0.0
        %1437 = vmatprep.subr.mxu0 0.0
        %1438 = vmatpush1.msra.mxu0 0.0
        %1439 = vmatprep.subr.mxu0 0.0
        %1440 = vmatpush1.msra.mxu0 0.0
        %1441 = vmatprep.subr.mxu0 0.0
        %1442 = vmatpush1.msra.mxu0 0.0
        %1443 = vmatprep.subr.mxu0 0.0
        %1444 = vmatpush1.msra.mxu0 0.0
        %1445 = vmatprep.subr.mxu0 0.0
        %1446 = vmatpush1.msra.mxu0 0.0
        %1447 = vmatprep.subr.mxu0 0.0
        %1448 = vmatpush1.msra.mxu0 0.0
        %1449 = vmatprep.subr.mxu0 0.0
        %1450 = vmatpush1.msra.mxu0 0.0
        %1451 = vmatprep.subr.mxu0 0.0
        %1452 = vmatpush1.msra.mxu0 0.0
        %1453 = vmatprep.subr.mxu0 0.0
        %1454 = vmatpush1.msra.mxu0 0.0
        %1455 = vmatprep.subr.mxu0 0.0
        %1456 = vmatpush1.msra.mxu0 0.0
        %1457 = vmatprep.mubr.f32.mxu0 0.0
        %1458 = vmatmul.mubr.f32.gmra.mrb[0].mxu0 %v1370
        %v1459 = vpop.f32.mrb[0].mxu0
        %v1460 = vadd.f32 0.0, %v1459
        %v1461 = vpop.f32.mrb[0].mxu0
        %v1462 = vadd.f32 0.0, %v1461
        %1463 = vmatprep.mubr.f32.mxu0 0.0
        %1464 = vmatmul.mubr.f32.gmra.mrb[0].mxu0 %v1373
        %v1465 = vpop.f32.mrb[0].mxu0
        %v1466 = vadd.f32 0.0, %v1465
        %v1467 = vpop.f32.mrb[0].mxu0
        %v1468 = vadd.f32 0.0, %v1467
        %1469 = vmatprep.mubr.f32.mxu0 0.0
        %1470 = vmatmul.mubr.f32.gmra.mrb[0].mxu0 %v1376
        %v1471 = vpop.f32.mrb[0].mxu0
        %v1472 = vadd.f32 0.0, %v1471
        %v1473 = vpop.f32.mrb[0].mxu0
        %v1474 = vadd.f32 0.0, %v1473
        %1475 = vmatprep.mubr.f32.mxu0 0.0
        %1476 = vmatmul.mubr.f32.gmra.mrb[0].mxu0 %v1379
        %v1477 = vpop.f32.mrb[0].mxu0
        %v1478 = vadd.f32 0.0, %v1477
        %v1479 = vpop.f32.mrb[0].mxu0
        %v1480 = vadd.f32 0.0, %v1479
        %1481 = vmatprep.mubr.f32.mxu0 0.0
        %1482 = vmatmul.mubr.f32.gmra.mrb[0].mxu0 %v1382
        %v1483 = vpop.f32.mrb[0].mxu0
        %v1484 = vadd.f32 0.0, %v1483
        %v1485 = vpop.f32.mrb[0].mxu0
        %v1486 = vadd.f32 0.0, %v1485
        %1487 = vmatprep.mubr.f32.mxu0 0.0
        %1488 = vmatmul.mubr.f32.gmra.mrb[0].mxu0 %v1385
        %v1489 = vpop.f32.mrb[0].mxu0
        %v1490 = vadd.f32 0.0, %v1489
        %v1491 = vpop.f32.mrb[0].mxu0
        %v1492 = vadd.f32 0.0, %v1491
        %1493 = vmatprep.mubr.f32.mxu0 0.0
        %1494 = vmatmul.mubr.f32.gmra.mrb[0].mxu0 %v1388
        %v1495 = vpop.f32.mrb[0].mxu0
        %v1496 = vadd.f32 0.0, %v1495
        %v1497 = vpop.f32.mrb[0].mxu0
        %v1498 = vadd.f32 0.0, %v1497
        %1499 = vmatprep.mubr.f32.mxu0 0.0
        %1500 = vmatmul.mubr.f32.gmra.mrb[0].mxu0 %v1391
        %v1501 = vpop.f32.mrb[0].mxu0
        %v1502 = vadd.f32 0.0, %v1501
        %v1503 = vpop.f32.mrb[0].mxu0
        %v1504 = vadd.f32 0.0, %v1503
        %1505 = vdwg.mxu0
        %v1506 = vmul.f32 %v1460, %v1294
        %v1507 = vmul.f32 %v1462, %v1295
        %v1508 = vmul.f32 %v1466, %v1296
        %v1509 = vmul.f32 %v1468, %v1297
        %v1510 = vmul.f32 %v1472, %v1298
        %v1511 = vmul.f32 %v1474, %v1299
        %v1512 = vmul.f32 %v1478, %v1300
        %v1513 = vmul.f32 %v1480, %v1301
        %v1514 = vmul.f32 %v1484, %v1302
        %v1515 = vmul.f32 %v1486, %v1303
        %v1516 = vmul.f32 %v1490, %v1304
        %v1517 = vmul.f32 %v1492, %v1305
        %v1518 = vmul.f32 %v1496, %v1306
        %v1519 = vmul.f32 %v1498, %v1307
        %v1520 = vmul.f32 %v1502, %v1308
        %v1521 = vmul.f32 %v1504, %v1309
        %v1522 = vld [vmem:[%s9] sm:$0xff]
        %v1523 = vld [vmem:[%s9 + $0x8] sm:$0xff]
        %v1524 = vld [vmem:[%s9 + $0x10] sm:$0xff]
        %v1525 = vld [vmem:[%s9 + $0x18] sm:$0xff]
        %v1526 = vld [vmem:[%s9 + $0x20] sm:$0xff]
        %v1527 = vld [vmem:[%s9 + $0x28] sm:$0xff]
        %v1528 = vld [vmem:[%s9 + $0x30] sm:$0xff]
        %v1529 = vld [vmem:[%s9 + $0x38] sm:$0xff]
        %v1530 = vld [vmem:[%s9 + $0x40] sm:$0xff]
        %v1531 = vld [vmem:[%s9 + $0x48] sm:$0xff]
        %v1532 = vld [vmem:[%s9 + $0x50] sm:$0xff]
        %v1533 = vld [vmem:[%s9 + $0x58] sm:$0xff]
        %v1534 = vld [vmem:[%s9 + $0x60] sm:$0xff]
        %v1535 = vld [vmem:[%s9 + $0x68] sm:$0xff]
        %v1536 = vld [vmem:[%s9 + $0x70] sm:$0xff]
        %v1537 = vld [vmem:[%s9 + $0x78] sm:$0xff]
        %v1538 = vld [vmem:[%s9 + $0x80] sm:$0xff]
        %v1539 = vld [vmem:[%s9 + $0x88] sm:$0xff]
        %v1540 = vld [vmem:[%s9 + $0x90] sm:$0xff]
        %v1541 = vld [vmem:[%s9 + $0x98] sm:$0xff]
        %v1542 = vld [vmem:[%s9 + $0xa0] sm:$0xff]
        %v1543 = vld [vmem:[%s9 + $0xa8] sm:$0xff]
        %v1544 = vld [vmem:[%s9 + $0xb0] sm:$0xff]
        %v1545 = vld [vmem:[%s9 + $0xb8] sm:$0xff]
        %v1546 = vld [vmem:[%s9 + $0xc0] sm:$0xff]
        %v1547 = vld [vmem:[%s9 + $0xc8] sm:$0xff]
        %v1548 = vld [vmem:[%s9 + $0xd0] sm:$0xff]
        %v1549 = vld [vmem:[%s9 + $0xd8] sm:$0xff]
        %v1550 = vld [vmem:[%s9 + $0xe0] sm:$0xff]
        %v1551 = vld [vmem:[%s9 + $0xe8] sm:$0xff]
        %v1552 = vld [vmem:[%s9 + $0xf0] sm:$0xff]
        %v1553 = vld [vmem:[%s9 + $0xf8] sm:$0xff]
        %1554 = vmatprep.subr.mxu0 0.0
        %1555 = vmatpush1.msra.mxu0 %v1522
        %1556 = vmatprep.subr.mxu0 0.0
        %1557 = vmatpush1.msra.mxu0 %v1523
        %1558 = vmatprep.subr.mxu0 0.0
        %1559 = vmatpush1.msra.mxu0 %v1524
        %1560 = vmatprep.subr.mxu0 0.0
        %1561 = vmatpush1.msra.mxu0 %v1525
        %1562 = vmatprep.subr.mxu0 0.0
        %1563 = vmatpush1.msra.mxu0 %v1526
        %1564 = vmatprep.subr.mxu0 0.0
        %1565 = vmatpush1.msra.mxu0 %v1527
        %1566 = vmatprep.subr.mxu0 0.0
        %1567 = vmatpush1.msra.mxu0 %v1528
        %1568 = vmatprep.subr.mxu0 0.0
        %1569 = vmatpush1.msra.mxu0 %v1529
        %1570 = vmatprep.subr.mxu0 0.0
        %1571 = vmatpush1.msra.mxu0 %v1530
        %1572 = vmatprep.subr.mxu0 0.0
        %1573 = vmatpush1.msra.mxu0 %v1531
        %1574 = vmatprep.subr.mxu0 0.0
        %1575 = vmatpush1.msra.mxu0 %v1532
        %1576 = vmatprep.subr.mxu0 0.0
        %1577 = vmatpush1.msra.mxu0 %v1533
        %1578 = vmatprep.subr.mxu0 0.0
        %1579 = vmatpush1.msra.mxu0 %v1534
        %1580 = vmatprep.subr.mxu0 0.0
        %1581 = vmatpush1.msra.mxu0 %v1535
        %1582 = vmatprep.subr.mxu0 0.0
        %1583 = vmatpush1.msra.mxu0 %v1536
        %1584 = vmatprep.subr.mxu0 0.0
        %1585 = vmatpush1.msra.mxu0 %v1537
        %1586 = vmatprep.subr.mxu0 0.0
        %1587 = vmatpush1.msra.mxu0 %v1538
        %1588 = vmatprep.subr.mxu0 0.0
        %1589 = vmatpush1.msra.mxu0 %v1539
        %1590 = vmatprep.subr.mxu0 0.0
        %1591 = vmatpush1.msra.mxu0 %v1540
        %1592 = vmatprep.subr.mxu0 0.0
        %1593 = vmatpush1.msra.mxu0 %v1541
        %1594 = vmatprep.subr.mxu0 0.0
        %1595 = vmatpush1.msra.mxu0 %v1542
        %1596 = vmatprep.subr.mxu0 0.0
        %1597 = vmatpush1.msra.mxu0 %v1543
        %1598 = vmatprep.subr.mxu0 0.0
        %1599 = vmatpush1.msra.mxu0 %v1544
        %1600 = vmatprep.subr.mxu0 0.0
        %1601 = vmatpush1.msra.mxu0 %v1545
        %1602 = vmatprep.subr.mxu0 0.0
        %1603 = vmatpush1.msra.mxu0 %v1546
        %1604 = vmatprep.subr.mxu0 0.0
        %1605 = vmatpush1.msra.mxu0 %v1547
        %1606 = vmatprep.subr.mxu0 0.0
        %1607 = vmatpush1.msra.mxu0 %v1548
        %1608 = vmatprep.subr.mxu0 0.0
        %1609 = vmatpush1.msra.mxu0 %v1549
        %1610 = vmatprep.subr.mxu0 0.0
        %1611 = vmatpush1.msra.mxu0 %v1550
        %1612 = vmatprep.subr.mxu0 0.0
        %1613 = vmatpush1.msra.mxu0 %v1551
        %1614 = vmatprep.subr.mxu0 0.0
        %1615 = vmatpush1.msra.mxu0 %v1552
        %1616 = vmatprep.subr.mxu0 0.0
        %1617 = vmatpush1.msra.mxu0 %v1553
        %1618 = vmatprep.mubr.f32.mxu0 %v1507
        %1619 = vmatmul.mubr.f32.gmra.mrb[0].mxu0 %v1506
        %v1620 = vpop.f32.mrb[0].mxu0
        %v1621 = vadd.f32 %v1116, %v1620
        %v1622 = vpop.f32.mrb[0].mxu0
        %1623 = vmatprep.mubr.f32.mxu0 %v1509
        %1624 = vmatmul.mubr.f32.gmra.mrb[0].mxu0 %v1508
        %v1625 = vpop.f32.mrb[0].mxu0
        %v1626 = vadd.f32 %v1119, %v1625
        %v1627 = vpop.f32.mrb[0].mxu0
        %1628 = vmatprep.mubr.f32.mxu0 %v1511
        %1629 = vmatmul.mubr.f32.gmra.mrb[0].mxu0 %v1510
        %v1630 = vpop.f32.mrb[0].mxu0
        %v1631 = vadd.f32 %v1124, %v1630
        %v1632 = vpop.f32.mrb[0].mxu0
        %1633 = vmatprep.mubr.f32.mxu0 %v1513
        %1634 = vmatmul.mubr.f32.gmra.mrb[0].mxu0 %v1512
        %v1635 = vpop.f32.mrb[0].mxu0
        %v1636 = vadd.f32 %v1127, %v1635
        %v1637 = vpop.f32.mrb[0].mxu0
        %1638 = vmatprep.mubr.f32.mxu0 %v1515
        %1639 = vmatmul.mubr.f32.gmra.mrb[0].mxu0 %v1514
        %v1640 = vpop.f32.mrb[0].mxu0
        %v1641 = vadd.f32 %v1132, %v1640
        %v1642 = vpop.f32.mrb[0].mxu0
        %1643 = vmatprep.mubr.f32.mxu0 %v1517
        %1644 = vmatmul.mubr.f32.gmra.mrb[0].mxu0 %v1516
        %v1645 = vpop.f32.mrb[0].mxu0
        %v1646 = vadd.f32 %v1135, %v1645
        %v1647 = vpop.f32.mrb[0].mxu0
        %1648 = vmatprep.mubr.f32.mxu0 %v1519
        %1649 = vmatmul.mubr.f32.gmra.mrb[0].mxu0 %v1518
        %v1650 = vpop.f32.mrb[0].mxu0
        %v1651 = vadd.f32 %v1140, %v1650
        %v1652 = vpop.f32.mrb[0].mxu0
        %1653 = vmatprep.mubr.f32.mxu0 %v1521
        %1654 = vmatmul.mubr.f32.gmra.mrb[0].mxu0 %v1520
        %v1655 = vpop.f32.mrb[0].mxu0
        %v1656 = vadd.f32 %v1143, %v1655
        %v1657 = vpop.f32.mrb[0].mxu0
        %1658 = vdwg.mxu0
        %v1659 = vmax.f32 %v1621, 0.0
        %v1660 = vmax.f32 %v1626, 0.0
        %v1661 = vmax.f32 %v1631, 0.0
        %v1662 = vmax.f32 %v1636, 0.0
        %v1663 = vmax.f32 %v1641, 0.0
        %v1664 = vmax.f32 %v1646, 0.0
        %v1665 = vmax.f32 %v1651, 0.0
        %v1666 = vmax.f32 %v1656, 0.0
        %1667 = vst.msk [vmem:[%s612] sm:$0xff] %vm1068, %v1659
        %1668 = vst.msk [vmem:[%s612 + $0x8] sm:$0xff] %vm1068, %v1660
        %1669 = vst.msk [vmem:[%s612 + $0x10] sm:$0xff] %vm1068, %v1661
        %1670 = vst.msk [vmem:[%s612 + $0x18] sm:$0xff] %vm1068, %v1662
        %1671 = vst.msk [vmem:[%s612 + $0x20] sm:$0xff] %vm1068, %v1663
        %1672 = vst.msk [vmem:[%s612 + $0x28] sm:$0xff] %vm1068, %v1664
        %1673 = vst.msk [vmem:[%s612 + $0x30] sm:$0xff] %vm1068, %v1665
        %1674 = vst.msk [vmem:[%s612 + $0x38] sm:$0xff] %vm1068, %v1666
        %s1675 = smul.u32 8, %s32
        %p1676 = scmp.lt.s32.totalorder %s31, 1
        %s1677 = scalar_select %p1676, %s31, 1
        %p1678 = scmp.lt.s32.totalorder %s1675, 15
        %s1679 = scalar_select %p1678, %s1675, 15
        %s1680 = smul.addr %s1677, 16
        %s1681 = sadd.s32 %s1679, %s1680
        %s1682 = smul.addr %s1681, 8
        %s1683 = scalar_lea.vmem %s10, %s1682
        // Predicated region
        $region73: #{tpu_custom_call.1} parent=59 // pred_check
          %p1684 = pneg %p317
        $region74: #{tpu_custom_call.1} parent=59 // pred_check_branch
          %1686 = sbr.rel (%p1684) target = $region76
        $region75: #{tpu_custom_call.1} parent=59 // pred_region
          %s1687 = smul.u32 8, %s32
        $region76: #{tpu_custom_call.1} parent=59 // pred_fallthru
          _
      $region60: #{tpu_custom_call.1} parent=5 // pred_fallthru
        _
      %p1688 = scmp.le.s32.totalorder 2, %s22
      // Predicated region
      $region77: #{tpu_custom_call.1} parent=5 // pred_check
        %p1689 = pneg %p1688
      $region78: #{tpu_custom_call.1} parent=5 // pred_check_branch
        %1691 = sbr.rel (%p1689) target = $region80
      $region79: #{tpu_custom_call.1} parent=5 // pred_region
        %s1692 = ssub.s32 %s22, 2
        // Predicated region
        $region81: #{tpu_custom_call.1} parent=79 // pred_check
          %p1693 = pneg %p323
        $region82: #{tpu_custom_call.1} parent=79 // pred_check_branch
          %1695 = sbr.rel (%p1693) target = $region84
        $region83: #{tpu_custom_call.1} parent=79 // pred_region
          %s1696 = smul.u32 8, %s34
          %p1697 = scmp.lt.s32.totalorder %s33, 1
          %s1698 = scalar_select %p1697, %s33, 1
          %p1699 = scmp.lt.s32.totalorder %s1696, 15
          %s1700 = scalar_select %p1699, %s1696, 15
          %s1701 = smul.addr %s1698, 16
          %s1702 = sadd.s32 %s1700, %s1701
          %s1703 = smul.addr %s1702, 8
          %s1704 = scalar_lea.vmem %s10, %s1703
        $region84: #{tpu_custom_call.1} parent=79 // pred_fallthru
          _
      $region80: #{tpu_custom_call.1} parent=5 // pred_fallthru
        _
    $region6: #{tpu_custom_call.1} parent=1 // loop_footer
      %s26 = sadd.s32 1, %s22
    $region7: #{tpu_custom_call.1} parent=1 // loop_footer_branch
      %21 = sbr.rel target = $region3
    $region8: #{tpu_custom_call.1} parent=1 // loop_exit
      _
    %1705 = vsyncpa [#allocation3], 1
    %s1706 = scalar_lea.sflag [#allocation3], 1
    %1707 = vsyncpa %s1706, 1
    %1708 = vsyncpa [#allocation5], 1
    %s1709 = scalar_lea.sflag [#allocation5], 1
    %1710 = vsyncpa %s1709, 1

</llo_original>
